<compile_context>
chip_gen: v7x
topology: tpu7x:2x2x1
jax: 0.10.0
libtpu: 0.0.40
codegen_flags: <defaults>
</compile_context>

<pallas_src>
import functools

import jax
import jax.numpy as jnp
from jax.experimental import pallas as pl
from jax.experimental.pallas import tpu as pltpu


# ----------------------------------------------------------------------------
# Fused kernel: encoder LSTM stack + nd lane-folded decoders + dense heads
# ----------------------------------------------------------------------------
def _make_fused_kernel(en_layers, de_layers, nd, batch, hidden, t_enc, t_dec):
    H = hidden
    HD = nd * hidden
    B = batch

    def kernel(*refs):
        idx = 0
        x_ref = refs[idx]; idx += 1                      # (T_enc*B, Din) time-major
        enc_refs = refs[idx:idx + 3 * en_layers]; idx += 3 * en_layers
        dwih0_ref = refs[idx]; idx += 1                  # (H, 4*HD) stacked layer-0 wih
        if de_layers > 1:
            dwihr_ref = refs[idx]; idx += 1              # (L-1, HD, 4*HD) block-diag
        dwhh_ref = refs[idx]                             # (L, HD, 4*HD) block-diag
        db_ref = refs[idx + 1]                           # (L, 1, 4*HD)
        dwd_ref = refs[idx + 2]                          # (HD, nd*Dout) block-diag
        dbd_ref = refs[idx + 3]                          # (1, nd*Dout)
        idx += 4
        feat_ref = refs[idx]                             # (B, H)      output
        out_ref = refs[idx + 1]                          # (T_dec*B, nd*Dout) output
        idx += 2
        scratch = refs[idx:]
        si = 0
        enc_hseq = None
        if en_layers > 1:
            enc_hseq = scratch[si]; si += 1              # (T_enc*B, H) VMEM
        dec_hseq = scratch[si]                           # (T_dec*B, HD) VMEM

        # -------------------- encoder --------------------
        seq2d = x_ref[...]                               # (T_enc*B, Din)
        h_sum = jnp.zeros((B, H), jnp.float32)
        for layer in range(en_layers):
            wih = enc_refs[3 * layer][...]               # (Din_l, 4H)
            whh = enc_refs[3 * layer + 1][...]           # (H, 4H)
            b = enc_refs[3 * layer + 2][...]             # (1, 4H)

            # Hoisted input projection (off the serial chain), bias folded in.
            xproj = jnp.dot(seq2d, wih, preferred_element_type=jnp.float32) + b

            h = jnp.zeros((B, H), jnp.float32)
            c = jnp.zeros((B, H), jnp.float32)
            write_seq = layer < en_layers - 1
            for t in range(t_enc):                       # fully unrolled (static T)
                gates = xproj[t * B:(t + 1) * B, :] + jnp.dot(
                    h, whh, preferred_element_type=jnp.float32)     # (B, 4H)
                sig = jax.nn.sigmoid(gates)              # one EUP pass / step
                tg = jnp.tanh(gates)
                c = sig[:, H:2 * H] * c + sig[:, 0:H] * tg[:, 2 * H:3 * H]
                h = sig[:, 3 * H:4 * H] * jnp.tanh(c)
                if write_seq:
                    enc_hseq[t * B:(t + 1) * B, :] = h
            if write_seq:
                seq2d = enc_hseq[...]
            h_sum = h_sum + h                            # h_n of this layer

        features = h_sum * (1.0 / float(en_layers))      # h_n.mean(dim=0)
        feat_ref[...] = features

        # -------------------- nd decoders (lane block-diag packed) -----------
        seq_bd = None
        for layer in range(de_layers):
            whh = dwhh_ref[layer]                        # (HD, 4*HD)
            b = db_ref[layer]                            # (1, 4*HD)
            if layer == 0:
                # Shared `features` input, loop-invariant over time -> once.
                xrow = jnp.dot(features, dwih0_ref[...],
                               preferred_element_type=jnp.float32) + b   # (B, 4*HD)
                xproj = None
            else:
                xrow = None
                xproj = jnp.dot(seq_bd, dwihr_ref[layer - 1],
                                preferred_element_type=jnp.float32) + b  # (T*B, 4*HD)

            h = jnp.zeros((B, HD), jnp.float32)
            c = jnp.zeros((B, HD), jnp.float32)
            for t in range(t_dec):                       # fully unrolled (static T)
                x_t = xrow if layer == 0 else xproj[t * B:(t + 1) * B, :]
                # One MXU pass + one sigmoid + one tanh for ALL decoders.
                z = x_t + jnp.dot(h, whh, preferred_element_type=jnp.float32)
                sig = jax.nn.sigmoid(z)
                tg = jnp.tanh(z)
                c = sig[:, HD:2 * HD] * c + sig[:, 0:HD] * tg[:, 2 * HD:3 * HD]
                h = sig[:, 3 * HD:4 * HD] * jnp.tanh(c)
                dec_hseq[t * B:(t + 1) * B, :] = h       # VMEM-resident hseq
            seq_bd = dec_hseq[...]                       # (T_dec*B, HD)

        # Fused dense heads of all decoders: one block-diag matmul, one store.
        out_ref[...] = (
            jnp.dot(seq_bd, dwd_ref[...], preferred_element_type=jnp.float32)
            + dbd_ref[...]).astype(out_ref.dtype)

    return kernel


# ----------------------------------------------------------------------------
# Wrapper around the single pallas_call
# ----------------------------------------------------------------------------
def lstm_ae_fused_call(x2d, enc_params, dec_params, *, batch, hidden, seqlen,
                       out_dim, en_layers, de_layers, decoder_num):
    t_enc = x2d.shape[0] // batch
    args = [x2d]
    for p in enc_params:
        args += [p["wih_t"], p["whh_t"], p["b"]]
    args.append(dec_params["wih0"])
    if de_layers > 1:
        args.append(dec_params["wih_rest"])
    args += [dec_params["whh"], dec_params["b"], dec_params["wd"], dec_params["bd"]]

    scratch = []
    if en_layers > 1:
        scratch.append(pltpu.VMEM((t_enc * batch, hidden), jnp.float32))
    scratch.append(pltpu.VMEM((seqlen * batch, decoder_num * hidden), jnp.float32))

    vmem_spec = pl.BlockSpec(memory_space=pltpu.MemorySpace.VMEM)
    features, out = pl.pallas_call(
        _make_fused_kernel(en_layers, de_layers, decoder_num, batch, hidden,
                           t_enc, seqlen),
        out_shape=(
            jax.ShapeDtypeStruct((batch, hidden), jnp.float32),
            jax.ShapeDtypeStruct((seqlen * batch, decoder_num * out_dim),
                                 jnp.float32),
        ),
        in_specs=[vmem_spec] * len(args),
        out_specs=(vmem_spec, vmem_spec),
        scratch_shapes=scratch,
    )(*args)
    return features, out


# ----------------------------------------------------------------------------
# Parameter init + block-diagonal packing (done once, outside the kernel)
# ----------------------------------------------------------------------------
def init_lstm_params(key, input_dim, hidden_dim, num_layers):
    params = []
    k = 1.0 / float(hidden_dim) ** 0.5
    for layer in range(num_layers):
        in_dim = input_dim if layer == 0 else hidden_dim
        key, k1, k2, k3, k4 = jax.random.split(key, 5)
        w_ih = jax.random.uniform(k1, (4 * hidden_dim, in_dim), jnp.float32, -k, k)
        w_hh = jax.random.uniform(k2, (4 * hidden_dim, hidden_dim), jnp.float32, -k, k)
        b_ih = jax.random.uniform(k3, (4 * hidden_dim,), jnp.float32, -k, k)
        b_hh = jax.random.uniform(k4, (4 * hidden_dim,), jnp.float32, -k, k)
        params.append(dict(
            wih_t=jnp.transpose(w_ih),                    # (in_dim, 4H) cols [i|f|g|o]
            whh_t=jnp.transpose(w_hh),                    # (H, 4H)
            b=(b_ih + b_hh).reshape(1, 4 * hidden_dim),   # combined bias
        ))
    return params, key


def _pack_gates_stacked(ws, H):
    """ws[d]: (in_dim, 4H), shared input -> (in_dim, nd*4H), gates grouped."""
    nd = len(ws)
    in_dim = ws[0].shape[0]
    out = jnp.zeros((in_dim, 4 * nd * H), jnp.float32)
    for d, w in enumerate(ws):
        for g in range(4):
            out = out.at[:, g * nd * H + d * H: g * nd * H + (d + 1) * H].set(
                w[:, g * H:(g + 1) * H])
    return out


def _pack_gates_blockdiag(ws, H):
    """ws[d]: (H, 4H) -> block-diag (nd*H, nd*4H), gates grouped along lanes."""
    nd = len(ws)
    out = jnp.zeros((nd * H, 4 * nd * H), jnp.float32)
    for d, w in enumerate(ws):
        for g in range(4):
            out = out.at[d * H:(d + 1) * H,
                         g * nd * H + d * H: g * nd * H + (d + 1) * H].set(
                w[:, g * H:(g + 1) * H])
    return out


def _pack_gate_bias(bs, H):
    nd = len(bs)
    out = jnp.zeros((1, 4 * nd * H), jnp.float32)
    for d, b in enumerate(bs):
        for g in range(4):
            out = out.at[:, g * nd * H + d * H: g * nd * H + (d + 1) * H].set(
                b[:, g * H:(g + 1) * H])
    return out


def init_decoder_params_packed(key, features_dim, out_dim, num_layers, decoder_num):
    H, nd = features_dim, decoder_num
    k = 1.0 / float(H) ** 0.5
    wih_layers = [[] for _ in range(num_layers)]
    whh_layers = [[] for _ in range(num_layers)]
    b_layers = [[] for _ in range(num_layers)]
    wd_list, bd_list = [], []
    for _ in range(nd):
        lstm_p, key = init_lstm_params(key, H, H, num_layers)
        for layer in range(num_layers):
            wih_layers[layer].append(lstm_p[layer]["wih_t"])   # (H, 4H)
            whh_layers[layer].append(lstm_p[layer]["whh_t"])   # (H, 4H)
            b_layers[layer].append(lstm_p[layer]["b"])         # (1, 4H)
        key, k1, k2 = jax.random.split(key, 3)
        w = jax.random.uniform(k1, (out_dim, H), jnp.float32, -k, k)
        b = jax.random.uniform(k2, (out_dim,), jnp.float32, -k, k)
        wd_list.append(jnp.transpose(w))                       # (H, Dout)
        bd_list.append(b.reshape(1, out_dim))

    # Block-diagonal dense head.
    wd = jnp.zeros((nd * H, nd * out_dim), jnp.float32)
    bd = jnp.zeros((1, nd * out_dim), jnp.float32)
    for d in range(nd):
        wd = wd.at[d * H:(d + 1) * H, d * out_dim:(d + 1) * out_dim].set(wd_list[d])
        bd = bd.at[:, d * out_dim:(d + 1) * out_dim].set(bd_list[d])

    params = dict(
        wih0=_pack_gates_stacked(wih_layers[0], H),                       # (H, 4*nd*H)
        whh=jnp.stack([_pack_gates_blockdiag(whh_layers[l], H)
                       for l in range(num_layers)]),                      # (L, nd*H, 4*nd*H)
        b=jnp.stack([_pack_gate_bias(b_layers[l], H)
                     for l in range(num_layers)]),                        # (L, 1, 4*nd*H)
        wd=wd,                                                            # (nd*H, nd*Dout)
        bd=bd,                                                            # (1, nd*Dout)
    )
    if num_layers > 1:
        params["wih_rest"] = jnp.stack([_pack_gates_blockdiag(wih_layers[l], H)
                                        for l in range(1, num_layers)])   # (L-1, nd*H, 4*nd*H)
    return params, key


# ----------------------------------------------------------------------------
# Model forward (mirrors LSTMAENet.forward)
# ----------------------------------------------------------------------------
def lstm_ae_forward(img, enc_params, dec_params, *, features_dim, seqlen,
                    en_layers, de_layers, decoder_num):
    B, _, T, Din = img.shape
    # util.img2seq (assumed): (B, 1, T, D) -> (B, T, D); then time-major flatten
    # so each timestep is a contiguous (B, D) row-slab inside the kernel.
    seq = img.reshape(B, T, Din)
    x2d = jnp.transpose(seq, (1, 0, 2)).reshape(T * B, Din)

    features, out = lstm_ae_fused_call(
        x2d, enc_params, dec_params,
        batch=B, hidden=features_dim, seqlen=seqlen, out_dim=Din,
        en_layers=en_layers, de_layers=de_layers, decoder_num=decoder_num)

    # out: (seqlen*B, nd*Din), rows time-major, columns grouped per decoder.
    out4 = out.reshape(seqlen, B, decoder_num, Din)
    out4 = jnp.transpose(out4, (2, 1, 0, 3))              # (nd, B, T, Din)
    # util.seq2img (assumed): (B, T, D) -> (B, 1, T, D)
    outputs = [out4[d][:, None, :, :] for d in range(decoder_num)]
    return outputs, features


# ----------------------------------------------------------------------------
# Main
# ----------------------------------------------------------------------------
if __name__ == "__main__":
    batch = 2
    input_dim = 16     # image row width (encoder input size / decoder output)
    features_dim = 32  # hidden / feature size (4H = 128 lanes on the encoder)
    seqlen = 8         # image height == encoder T == decoder seqlen
    en_layers = 1
    de_layers = 1
    decoder_num = 2

    key = jax.random.PRNGKey(0)
    enc_params, key = init_lstm_params(key, input_dim, features_dim, en_layers)
    dec_params, key = init_decoder_params_packed(key, features_dim, input_dim,
                                                 de_layers, decoder_num)

    key, xkey = jax.random.split(key)
    img = jax.random.normal(xkey, (batch, 1, seqlen, input_dim), jnp.float32)

    fwd = jax.jit(functools.partial(
        lstm_ae_forward, features_dim=features_dim, seqlen=seqlen,
        en_layers=en_layers, de_layers=de_layers, decoder_num=decoder_num))
    outputs, features = fwd(img, enc_params, dec_params)

    jax.block_until_ready(features)
    for o in outputs:
        jax.block_until_ready(o)

    assert features.shape == (batch, features_dim)
    for o in outputs:
        assert o.shape == (batch, 1, seqlen, input_dim)

    print("KERNEL_OK")
</pallas_src>

<mosaic_0001>
module attributes {stable_mosaic.version = 11 : i64} {
  func.func @kernel(%arg0: memref<16x16xf32, #tpu.memory_space<vmem>>, %arg1: memref<16x128xf32, #tpu.memory_space<vmem>>, %arg2: memref<32x128xf32, #tpu.memory_space<vmem>>, %arg3: memref<1x128xf32, #tpu.memory_space<vmem>>, %arg4: memref<32x256xf32, #tpu.memory_space<vmem>>, %arg5: memref<1x64x256xf32, #tpu.memory_space<vmem>>, %arg6: memref<1x1x256xf32, #tpu.memory_space<vmem>>, %arg7: memref<64x32xf32, #tpu.memory_space<vmem>>, %arg8: memref<1x32xf32, #tpu.memory_space<vmem>>, %arg9: memref<2x32xf32, #tpu.memory_space<vmem>>, %arg10: memref<16x32xf32, #tpu.memory_space<vmem>>, %arg11: memref<16x64xf32, #tpu.memory_space<vmem>>) attributes {dimension_semantics = [], scalar_prefetch = 0 : i64, scratch_operands = 1 : i64, tpu.core_type = #tpu.core_type<tc>} {
    %c0 = arith.constant 0 : index
    %c0_0 = arith.constant 0 : index
    %0 = vector.load %arg0[%c0, %c0_0] : memref<16x16xf32, #tpu.memory_space<vmem>>, vector<16x16xf32>
    %cst = arith.constant 0.000000e+00 : f32
    %1 = vector.broadcast %cst : f32 to vector<2x32xf32>
    %c0_1 = arith.constant 0 : index
    %c0_2 = arith.constant 0 : index
    %2 = vector.load %arg1[%c0_1, %c0_2] : memref<16x128xf32, #tpu.memory_space<vmem>>, vector<16x128xf32>
    %c0_3 = arith.constant 0 : index
    %c0_4 = arith.constant 0 : index
    %3 = vector.load %arg2[%c0_3, %c0_4] : memref<32x128xf32, #tpu.memory_space<vmem>>, vector<32x128xf32>
    %c0_5 = arith.constant 0 : index
    %c0_6 = arith.constant 0 : index
    %4 = vector.load %arg3[%c0_5, %c0_6] : memref<1x128xf32, #tpu.memory_space<vmem>>, vector<1x128xf32>
    %cst_7 = arith.constant dense<0.000000e+00> : vector<16x128xf32>
    %5 = tpu.matmul %0, %2, %cst_7 {dimension_numbers = #tpu.dot_dimension_numbers<[1], [0], [0], [1], [0, 0, 1, 1], [], []>} : vector<16x16xf32>, vector<16x128xf32>, vector<16x128xf32> -> vector<16x128xf32>
    %6 = vector.broadcast %4 : vector<1x128xf32> to vector<16x128xf32>
    %7 = arith.addf %5, %6 : vector<16x128xf32>
    %cst_8 = arith.constant 0.000000e+00 : f32
    %8 = vector.broadcast %cst_8 : f32 to vector<2x32xf32>
    %cst_9 = arith.constant 0.000000e+00 : f32
    %9 = vector.broadcast %cst_9 : f32 to vector<2x32xf32>
    %10 = vector.extract_strided_slice %7 {offsets = [0, 0], sizes = [2, 128], strides = [1, 1]} : vector<16x128xf32> to vector<2x128xf32>
    %cst_10 = arith.constant dense<0.000000e+00> : vector<2x128xf32>
    %11 = tpu.matmul %8, %3, %cst_10 {dimension_numbers = #tpu.dot_dimension_numbers<[1], [0], [0], [1], [0, 0, 1, 1], [], []>} : vector<2x32xf32>, vector<32x128xf32>, vector<2x128xf32> -> vector<2x128xf32>
    %12 = arith.addf %10, %11 : vector<2x128xf32>
    %13 = arith.negf %12 : vector<2x128xf32>
    %14 = math.exp %13 : vector<2x128xf32>
    %cst_11 = arith.constant 1.000000e+00 : f32
    %15 = vector.broadcast %cst_11 : f32 to vector<2x128xf32>
    %16 = arith.addf %15, %14 : vector<2x128xf32>
    %17 = arith.divf %15, %16 : vector<2x128xf32>
    %18 = math.tanh %12 : vector<2x128xf32>
    %19 = vector.extract_strided_slice %17 {offsets = [0, 32], sizes = [2, 32], strides = [1, 1]} : vector<2x128xf32> to vector<2x32xf32>
    %20 = arith.mulf %19, %9 : vector<2x32xf32>
    %21 = vector.extract_strided_slice %17 {offsets = [0, 0], sizes = [2, 32], strides = [1, 1]} : vector<2x128xf32> to vector<2x32xf32>
    %22 = vector.extract_strided_slice %18 {offsets = [0, 64], sizes = [2, 32], strides = [1, 1]} : vector<2x128xf32> to vector<2x32xf32>
    %23 = arith.mulf %21, %22 : vector<2x32xf32>
    %24 = arith.addf %20, %23 : vector<2x32xf32>
    %25 = vector.extract_strided_slice %17 {offsets = [0, 96], sizes = [2, 32], strides = [1, 1]} : vector<2x128xf32> to vector<2x32xf32>
    %26 = math.tanh %24 : vector<2x32xf32>
    %27 = arith.mulf %25, %26 : vector<2x32xf32>
    %28 = vector.extract_strided_slice %7 {offsets = [2, 0], sizes = [2, 128], strides = [1, 1]} : vector<16x128xf32> to vector<2x128xf32>
    %cst_12 = arith.constant dense<0.000000e+00> : vector<2x128xf32>
    %29 = tpu.matmul %27, %3, %cst_12 {dimension_numbers = #tpu.dot_dimension_numbers<[1], [0], [0], [1], [0, 0, 1, 1], [], []>} : vector<2x32xf32>, vector<32x128xf32>, vector<2x128xf32> -> vector<2x128xf32>
    %30 = arith.addf %28, %29 : vector<2x128xf32>
    %31 = arith.negf %30 : vector<2x128xf32>
    %32 = math.exp %31 : vector<2x128xf32>
    %cst_13 = arith.constant 1.000000e+00 : f32
    %33 = vector.broadcast %cst_13 : f32 to vector<2x128xf32>
    %34 = arith.addf %33, %32 : vector<2x128xf32>
    %35 = arith.divf %33, %34 : vector<2x128xf32>
    %36 = math.tanh %30 : vector<2x128xf32>
    %37 = vector.extract_strided_slice %35 {offsets = [0, 32], sizes = [2, 32], strides = [1, 1]} : vector<2x128xf32> to vector<2x32xf32>
    %38 = arith.mulf %37, %24 : vector<2x32xf32>
    %39 = vector.extract_strided_slice %35 {offsets = [0, 0], sizes = [2, 32], strides = [1, 1]} : vector<2x128xf32> to vector<2x32xf32>
    %40 = vector.extract_strided_slice %36 {offsets = [0, 64], sizes = [2, 32], strides = [1, 1]} : vector<2x128xf32> to vector<2x32xf32>
    %41 = arith.mulf %39, %40 : vector<2x32xf32>
    %42 = arith.addf %38, %41 : vector<2x32xf32>
    %43 = vector.extract_strided_slice %35 {offsets = [0, 96], sizes = [2, 32], strides = [1, 1]} : vector<2x128xf32> to vector<2x32xf32>
    %44 = math.tanh %42 : vector<2x32xf32>
    %45 = arith.mulf %43, %44 : vector<2x32xf32>
    %46 = vector.extract_strided_slice %7 {offsets = [4, 0], sizes = [2, 128], strides = [1, 1]} : vector<16x128xf32> to vector<2x128xf32>
    %cst_14 = arith.constant dense<0.000000e+00> : vector<2x128xf32>
    %47 = tpu.matmul %45, %3, %cst_14 {dimension_numbers = #tpu.dot_dimension_numbers<[1], [0], [0], [1], [0, 0, 1, 1], [], []>} : vector<2x32xf32>, vector<32x128xf32>, vector<2x128xf32> -> vector<2x128xf32>
    %48 = arith.addf %46, %47 : vector<2x128xf32>
    %49 = arith.negf %48 : vector<2x128xf32>
    %50 = math.exp %49 : vector<2x128xf32>
    %cst_15 = arith.constant 1.000000e+00 : f32
    %51 = vector.broadcast %cst_15 : f32 to vector<2x128xf32>
    %52 = arith.addf %51, %50 : vector<2x128xf32>
    %53 = arith.divf %51, %52 : vector<2x128xf32>
    %54 = math.tanh %48 : vector<2x128xf32>
    %55 = vector.extract_strided_slice %53 {offsets = [0, 32], sizes = [2, 32], strides = [1, 1]} : vector<2x128xf32> to vector<2x32xf32>
    %56 = arith.mulf %55, %42 : vector<2x32xf32>
    %57 = vector.extract_strided_slice %53 {offsets = [0, 0], sizes = [2, 32], strides = [1, 1]} : vector<2x128xf32> to vector<2x32xf32>
    %58 = vector.extract_strided_slice %54 {offsets = [0, 64], sizes = [2, 32], strides = [1, 1]} : vector<2x128xf32> to vector<2x32xf32>
    %59 = arith.mulf %57, %58 : vector<2x32xf32>
    %60 = arith.addf %56, %59 : vector<2x32xf32>
    %61 = vector.extract_strided_slice %53 {offsets = [0, 96], sizes = [2, 32], strides = [1, 1]} : vector<2x128xf32> to vector<2x32xf32>
    %62 = math.tanh %60 : vector<2x32xf32>
    %63 = arith.mulf %61, %62 : vector<2x32xf32>
    %64 = vector.extract_strided_slice %7 {offsets = [6, 0], sizes = [2, 128], strides = [1, 1]} : vector<16x128xf32> to vector<2x128xf32>
    %cst_16 = arith.constant dense<0.000000e+00> : vector<2x128xf32>
    %65 = tpu.matmul %63, %3, %cst_16 {dimension_numbers = #tpu.dot_dimension_numbers<[1], [0], [0], [1], [0, 0, 1, 1], [], []>} : vector<2x32xf32>, vector<32x128xf32>, vector<2x128xf32> -> vector<2x128xf32>
    %66 = arith.addf %64, %65 : vector<2x128xf32>
    %67 = arith.negf %66 : vector<2x128xf32>
    %68 = math.exp %67 : vector<2x128xf32>
    %cst_17 = arith.constant 1.000000e+00 : f32
    %69 = vector.broadcast %cst_17 : f32 to vector<2x128xf32>
    %70 = arith.addf %69, %68 : vector<2x128xf32>
    %71 = arith.divf %69, %70 : vector<2x128xf32>
    %72 = math.tanh %66 : vector<2x128xf32>
    %73 = vector.extract_strided_slice %71 {offsets = [0, 32], sizes = [2, 32], strides = [1, 1]} : vector<2x128xf32> to vector<2x32xf32>
    %74 = arith.mulf %73, %60 : vector<2x32xf32>
    %75 = vector.extract_strided_slice %71 {offsets = [0, 0], sizes = [2, 32], strides = [1, 1]} : vector<2x128xf32> to vector<2x32xf32>
    %76 = vector.extract_strided_slice %72 {offsets = [0, 64], sizes = [2, 32], strides = [1, 1]} : vector<2x128xf32> to vector<2x32xf32>
    %77 = arith.mulf %75, %76 : vector<2x32xf32>
    %78 = arith.addf %74, %77 : vector<2x32xf32>
    %79 = vector.extract_strided_slice %71 {offsets = [0, 96], sizes = [2, 32], strides = [1, 1]} : vector<2x128xf32> to vector<2x32xf32>
    %80 = math.tanh %78 : vector<2x32xf32>
    %81 = arith.mulf %79, %80 : vector<2x32xf32>
    %82 = vector.extract_strided_slice %7 {offsets = [8, 0], sizes = [2, 128], strides = [1, 1]} : vector<16x128xf32> to vector<2x128xf32>
    %cst_18 = arith.constant dense<0.000000e+00> : vector<2x128xf32>
    %83 = tpu.matmul %81, %3, %cst_18 {dimension_numbers = #tpu.dot_dimension_numbers<[1], [0], [0], [1], [0, 0, 1, 1], [], []>} : vector<2x32xf32>, vector<32x128xf32>, vector<2x128xf32> -> vector<2x128xf32>
    %84 = arith.addf %82, %83 : vector<2x128xf32>
    %85 = arith.negf %84 : vector<2x128xf32>
    %86 = math.exp %85 : vector<2x128xf32>
    %cst_19 = arith.constant 1.000000e+00 : f32
    %87 = vector.broadcast %cst_19 : f32 to vector<2x128xf32>
    %88 = arith.addf %87, %86 : vector<2x128xf32>
    %89 = arith.divf %87, %88 : vector<2x128xf32>
    %90 = math.tanh %84 : vector<2x128xf32>
    %91 = vector.extract_strided_slice %89 {offsets = [0, 32], sizes = [2, 32], strides = [1, 1]} : vector<2x128xf32> to vector<2x32xf32>
    %92 = arith.mulf %91, %78 : vector<2x32xf32>
    %93 = vector.extract_strided_slice %89 {offsets = [0, 0], sizes = [2, 32], strides = [1, 1]} : vector<2x128xf32> to vector<2x32xf32>
    %94 = vector.extract_strided_slice %90 {offsets = [0, 64], sizes = [2, 32], strides = [1, 1]} : vector<2x128xf32> to vector<2x32xf32>
    %95 = arith.mulf %93, %94 : vector<2x32xf32>
    %96 = arith.addf %92, %95 : vector<2x32xf32>
    %97 = vector.extract_strided_slice %89 {offsets = [0, 96], sizes = [2, 32], strides = [1, 1]} : vector<2x128xf32> to vector<2x32xf32>
    %98 = math.tanh %96 : vector<2x32xf32>
    %99 = arith.mulf %97, %98 : vector<2x32xf32>
    %100 = vector.extract_strided_slice %7 {offsets = [10, 0], sizes = [2, 128], strides = [1, 1]} : vector<16x128xf32> to vector<2x128xf32>
    %cst_20 = arith.constant dense<0.000000e+00> : vector<2x128xf32>
    %101 = tpu.matmul %99, %3, %cst_20 {dimension_numbers = #tpu.dot_dimension_numbers<[1], [0], [0], [1], [0, 0, 1, 1], [], []>} : vector<2x32xf32>, vector<32x128xf32>, vector<2x128xf32> -> vector<2x128xf32>
    %102 = arith.addf %100, %101 : vector<2x128xf32>
    %103 = arith.negf %102 : vector<2x128xf32>
    %104 = math.exp %103 : vector<2x128xf32>
    %cst_21 = arith.constant 1.000000e+00 : f32
    %105 = vector.broadcast %cst_21 : f32 to vector<2x128xf32>
    %106 = arith.addf %105, %104 : vector<2x128xf32>
    %107 = arith.divf %105, %106 : vector<2x128xf32>
    %108 = math.tanh %102 : vector<2x128xf32>
    %109 = vector.extract_strided_slice %107 {offsets = [0, 32], sizes = [2, 32], strides = [1, 1]} : vector<2x128xf32> to vector<2x32xf32>
    %110 = arith.mulf %109, %96 : vector<2x32xf32>
    %111 = vector.extract_strided_slice %107 {offsets = [0, 0], sizes = [2, 32], strides = [1, 1]} : vector<2x128xf32> to vector<2x32xf32>
    %112 = vector.extract_strided_slice %108 {offsets = [0, 64], sizes = [2, 32], strides = [1, 1]} : vector<2x128xf32> to vector<2x32xf32>
    %113 = arith.mulf %111, %112 : vector<2x32xf32>
    %114 = arith.addf %110, %113 : vector<2x32xf32>
    %115 = vector.extract_strided_slice %107 {offsets = [0, 96], sizes = [2, 32], strides = [1, 1]} : vector<2x128xf32> to vector<2x32xf32>
    %116 = math.tanh %114 : vector<2x32xf32>
    %117 = arith.mulf %115, %116 : vector<2x32xf32>
    %118 = vector.extract_strided_slice %7 {offsets = [12, 0], sizes = [2, 128], strides = [1, 1]} : vector<16x128xf32> to vector<2x128xf32>
    %cst_22 = arith.constant dense<0.000000e+00> : vector<2x128xf32>
    %119 = tpu.matmul %117, %3, %cst_22 {dimension_numbers = #tpu.dot_dimension_numbers<[1], [0], [0], [1], [0, 0, 1, 1], [], []>} : vector<2x32xf32>, vector<32x128xf32>, vector<2x128xf32> -> vector<2x128xf32>
    %120 = arith.addf %118, %119 : vector<2x128xf32>
    %121 = arith.negf %120 : vector<2x128xf32>
    %122 = math.exp %121 : vector<2x128xf32>
    %cst_23 = arith.constant 1.000000e+00 : f32
    %123 = vector.broadcast %cst_23 : f32 to vector<2x128xf32>
    %124 = arith.addf %123, %122 : vector<2x128xf32>
    %125 = arith.divf %123, %124 : vector<2x128xf32>
    %126 = math.tanh %120 : vector<2x128xf32>
    %127 = vector.extract_strided_slice %125 {offsets = [0, 32], sizes = [2, 32], strides = [1, 1]} : vector<2x128xf32> to vector<2x32xf32>
    %128 = arith.mulf %127, %114 : vector<2x32xf32>
    %129 = vector.extract_strided_slice %125 {offsets = [0, 0], sizes = [2, 32], strides = [1, 1]} : vector<2x128xf32> to vector<2x32xf32>
    %130 = vector.extract_strided_slice %126 {offsets = [0, 64], sizes = [2, 32], strides = [1, 1]} : vector<2x128xf32> to vector<2x32xf32>
    %131 = arith.mulf %129, %130 : vector<2x32xf32>
    %132 = arith.addf %128, %131 : vector<2x32xf32>
    %133 = vector.extract_strided_slice %125 {offsets = [0, 96], sizes = [2, 32], strides = [1, 1]} : vector<2x128xf32> to vector<2x32xf32>
    %134 = math.tanh %132 : vector<2x32xf32>
    %135 = arith.mulf %133, %134 : vector<2x32xf32>
    %136 = vector.extract_strided_slice %7 {offsets = [14, 0], sizes = [2, 128], strides = [1, 1]} : vector<16x128xf32> to vector<2x128xf32>
    %cst_24 = arith.constant dense<0.000000e+00> : vector<2x128xf32>
    %137 = tpu.matmul %135, %3, %cst_24 {dimension_numbers = #tpu.dot_dimension_numbers<[1], [0], [0], [1], [0, 0, 1, 1], [], []>} : vector<2x32xf32>, vector<32x128xf32>, vector<2x128xf32> -> vector<2x128xf32>
    %138 = arith.addf %136, %137 : vector<2x128xf32>
    %139 = arith.negf %138 : vector<2x128xf32>
    %140 = math.exp %139 : vector<2x128xf32>
    %cst_25 = arith.constant 1.000000e+00 : f32
    %141 = vector.broadcast %cst_25 : f32 to vector<2x128xf32>
    %142 = arith.addf %141, %140 : vector<2x128xf32>
    %143 = arith.divf %141, %142 : vector<2x128xf32>
    %144 = math.tanh %138 : vector<2x128xf32>
    %145 = vector.extract_strided_slice %143 {offsets = [0, 32], sizes = [2, 32], strides = [1, 1]} : vector<2x128xf32> to vector<2x32xf32>
    %146 = arith.mulf %145, %132 : vector<2x32xf32>
    %147 = vector.extract_strided_slice %143 {offsets = [0, 0], sizes = [2, 32], strides = [1, 1]} : vector<2x128xf32> to vector<2x32xf32>
    %148 = vector.extract_strided_slice %144 {offsets = [0, 64], sizes = [2, 32], strides = [1, 1]} : vector<2x128xf32> to vector<2x32xf32>
    %149 = arith.mulf %147, %148 : vector<2x32xf32>
    %150 = arith.addf %146, %149 : vector<2x32xf32>
    %151 = vector.extract_strided_slice %143 {offsets = [0, 96], sizes = [2, 32], strides = [1, 1]} : vector<2x128xf32> to vector<2x32xf32>
    %152 = math.tanh %150 : vector<2x32xf32>
    %153 = arith.mulf %151, %152 : vector<2x32xf32>
    %154 = arith.addf %1, %153 : vector<2x32xf32>
    %cst_26 = arith.constant 1.000000e+00 : f32
    %155 = vector.broadcast %cst_26 : f32 to vector<2x32xf32>
    %156 = arith.mulf %154, %155 : vector<2x32xf32>
    %c0_27 = arith.constant 0 : index
    %c0_28 = arith.constant 0 : index
    %157 = vector.load %arg9[%c0_27, %c0_28] : memref<2x32xf32, #tpu.memory_space<vmem>>, vector<2x32xf32>
    tpu.vector_store %arg9[%c0_27, %c0_28], %156 {strides = array<i32>} : memref<2x32xf32, #tpu.memory_space<vmem>>, vector<2x32xf32>,
    %c0_29 = arith.constant 0 : index
    %c0_30 = arith.constant 0 : index
    %c0_31 = arith.constant 0 : index
    %158 = vector.load %arg5[%c0_29, %c0_30, %c0_31] : memref<1x64x256xf32, #tpu.memory_space<vmem>>, vector<1x64x256xf32>
    %159 = vector.shape_cast %158 : vector<1x64x256xf32> to vector<64x256xf32>
    %c0_32 = arith.constant 0 : index
    %c0_33 = arith.constant 0 : index
    %c0_34 = arith.constant 0 : index
    %160 = vector.load %arg6[%c0_32, %c0_33, %c0_34] : memref<1x1x256xf32, #tpu.memory_space<vmem>>, vector<1x1x256xf32>
    %161 = vector.shape_cast %160 : vector<1x1x256xf32> to vector<1x256xf32>
    %c0_35 = arith.constant 0 : index
    %c0_36 = arith.constant 0 : index
    %162 = vector.load %arg4[%c0_35, %c0_36] : memref<32x256xf32, #tpu.memory_space<vmem>>, vector<32x256xf32>
    %cst_37 = arith.constant dense<0.000000e+00> : vector<2x256xf32>
    %163 = tpu.matmul %156, %162, %cst_37 {dimension_numbers = #tpu.dot_dimension_numbers<[1], [0], [0], [1], [0, 0, 1, 1], [], []>} : vector<2x32xf32>, vector<32x256xf32>, vector<2x256xf32> -> vector<2x256xf32>
    %164 = vector.broadcast %161 : vector<1x256xf32> to vector<2x256xf32>
    %165 = arith.addf %163, %164 : vector<2x256xf32>
    %cst_38 = arith.constant 0.000000e+00 : f32
    %166 = vector.broadcast %cst_38 : f32 to vector<2x64xf32>
    %cst_39 = arith.constant 0.000000e+00 : f32
    %167 = vector.broadcast %cst_39 : f32 to vector<2x64xf32>
    %cst_40 = arith.constant dense<0.000000e+00> : vector<2x256xf32>
    %168 = tpu.matmul %166, %159, %cst_40 {dimension_numbers = #tpu.dot_dimension_numbers<[1], [0], [0], [1], [0, 0, 1, 1], [], []>} : vector<2x64xf32>, vector<64x256xf32>, vector<2x256xf32> -> vector<2x256xf32>
    %169 = arith.addf %165, %168 : vector<2x256xf32>
    %170 = arith.negf %169 : vector<2x256xf32>
    %171 = math.exp %170 : vector<2x256xf32>
    %cst_41 = arith.constant 1.000000e+00 : f32
    %172 = vector.broadcast %cst_41 : f32 to vector<2x256xf32>
    %173 = arith.addf %172, %171 : vector<2x256xf32>
    %174 = arith.divf %172, %173 : vector<2x256xf32>
    %175 = math.tanh %169 : vector<2x256xf32>
    %176 = vector.extract_strided_slice %174 {offsets = [0, 64], sizes = [2, 64], strides = [1, 1]} : vector<2x256xf32> to vector<2x64xf32>
    %177 = arith.mulf %176, %167 : vector<2x64xf32>
    %178 = vector.extract_strided_slice %174 {offsets = [0, 0], sizes = [2, 64], strides = [1, 1]} : vector<2x256xf32> to vector<2x64xf32>
    %179 = vector.extract_strided_slice %175 {offsets = [0, 128], sizes = [2, 64], strides = [1, 1]} : vector<2x256xf32> to vector<2x64xf32>
    %180 = arith.mulf %178, %179 : vector<2x64xf32>
    %181 = arith.addf %177, %180 : vector<2x64xf32>
    %182 = vector.extract_strided_slice %174 {offsets = [0, 192], sizes = [2, 64], strides = [1, 1]} : vector<2x256xf32> to vector<2x64xf32>
    %183 = math.tanh %181 : vector<2x64xf32>
    %184 = arith.mulf %182, %183 : vector<2x64xf32>
    %c0_42 = arith.constant 0 : index
    %c0_43 = arith.constant 0 : index
    %185 = vector.load %arg11[%c0_42, %c0_43] : memref<16x64xf32, #tpu.memory_space<vmem>>, vector<2x64xf32>
    tpu.vector_store %arg11[%c0_42, %c0_43], %184 {strides = array<i32>} : memref<16x64xf32, #tpu.memory_space<vmem>>, vector<2x64xf32>,
    %cst_44 = arith.constant dense<0.000000e+00> : vector<2x256xf32>
    %186 = tpu.matmul %184, %159, %cst_44 {dimension_numbers = #tpu.dot_dimension_numbers<[1], [0], [0], [1], [0, 0, 1, 1], [], []>} : vector<2x64xf32>, vector<64x256xf32>, vector<2x256xf32> -> vector<2x256xf32>
    %187 = arith.addf %165, %186 : vector<2x256xf32>
    %188 = arith.negf %187 : vector<2x256xf32>
    %189 = math.exp %188 : vector<2x256xf32>
    %cst_45 = arith.constant 1.000000e+00 : f32
    %190 = vector.broadcast %cst_45 : f32 to vector<2x256xf32>
    %191 = arith.addf %190, %189 : vector<2x256xf32>
    %192 = arith.divf %190, %191 : vector<2x256xf32>
    %193 = math.tanh %187 : vector<2x256xf32>
    %194 = vector.extract_strided_slice %192 {offsets = [0, 64], sizes = [2, 64], strides = [1, 1]} : vector<2x256xf32> to vector<2x64xf32>
    %195 = arith.mulf %194, %181 : vector<2x64xf32>
    %196 = vector.extract_strided_slice %192 {offsets = [0, 0], sizes = [2, 64], strides = [1, 1]} : vector<2x256xf32> to vector<2x64xf32>
    %197 = vector.extract_strided_slice %193 {offsets = [0, 128], sizes = [2, 64], strides = [1, 1]} : vector<2x256xf32> to vector<2x64xf32>
    %198 = arith.mulf %196, %197 : vector<2x64xf32>
    %199 = arith.addf %195, %198 : vector<2x64xf32>
    %200 = vector.extract_strided_slice %192 {offsets = [0, 192], sizes = [2, 64], strides = [1, 1]} : vector<2x256xf32> to vector<2x64xf32>
    %201 = math.tanh %199 : vector<2x64xf32>
    %202 = arith.mulf %200, %201 : vector<2x64xf32>
    %c2 = arith.constant 2 : index
    %c0_46 = arith.constant 0 : index
    %203 = vector.load %arg11[%c2, %c0_46] : memref<16x64xf32, #tpu.memory_space<vmem>>, vector<2x64xf32>
    tpu.vector_store %arg11[%c2, %c0_46], %202 {strides = array<i32>} : memref<16x64xf32, #tpu.memory_space<vmem>>, vector<2x64xf32>,
    %cst_47 = arith.constant dense<0.000000e+00> : vector<2x256xf32>
    %204 = tpu.matmul %202, %159, %cst_47 {dimension_numbers = #tpu.dot_dimension_numbers<[1], [0], [0], [1], [0, 0, 1, 1], [], []>} : vector<2x64xf32>, vector<64x256xf32>, vector<2x256xf32> -> vector<2x256xf32>
    %205 = arith.addf %165, %204 : vector<2x256xf32>
    %206 = arith.negf %205 : vector<2x256xf32>
    %207 = math.exp %206 : vector<2x256xf32>
    %cst_48 = arith.constant 1.000000e+00 : f32
    %208 = vector.broadcast %cst_48 : f32 to vector<2x256xf32>
    %209 = arith.addf %208, %207 : vector<2x256xf32>
    %210 = arith.divf %208, %209 : vector<2x256xf32>
    %211 = math.tanh %205 : vector<2x256xf32>
    %212 = vector.extract_strided_slice %210 {offsets = [0, 64], sizes = [2, 64], strides = [1, 1]} : vector<2x256xf32> to vector<2x64xf32>
    %213 = arith.mulf %212, %199 : vector<2x64xf32>
    %214 = vector.extract_strided_slice %210 {offsets = [0, 0], sizes = [2, 64], strides = [1, 1]} : vector<2x256xf32> to vector<2x64xf32>
    %215 = vector.extract_strided_slice %211 {offsets = [0, 128], sizes = [2, 64], strides = [1, 1]} : vector<2x256xf32> to vector<2x64xf32>
    %216 = arith.mulf %214, %215 : vector<2x64xf32>
    %217 = arith.addf %213, %216 : vector<2x64xf32>
    %218 = vector.extract_strided_slice %210 {offsets = [0, 192], sizes = [2, 64], strides = [1, 1]} : vector<2x256xf32> to vector<2x64xf32>
    %219 = math.tanh %217 : vector<2x64xf32>
    %220 = arith.mulf %218, %219 : vector<2x64xf32>
    %c4 = arith.constant 4 : index
    %c0_49 = arith.constant 0 : index
    %221 = vector.load %arg11[%c4, %c0_49] : memref<16x64xf32, #tpu.memory_space<vmem>>, vector<2x64xf32>
    tpu.vector_store %arg11[%c4, %c0_49], %220 {strides = array<i32>} : memref<16x64xf32, #tpu.memory_space<vmem>>, vector<2x64xf32>,
    %cst_50 = arith.constant dense<0.000000e+00> : vector<2x256xf32>
    %222 = tpu.matmul %220, %159, %cst_50 {dimension_numbers = #tpu.dot_dimension_numbers<[1], [0], [0], [1], [0, 0, 1, 1], [], []>} : vector<2x64xf32>, vector<64x256xf32>, vector<2x256xf32> -> vector<2x256xf32>
    %223 = arith.addf %165, %222 : vector<2x256xf32>
    %224 = arith.negf %223 : vector<2x256xf32>
    %225 = math.exp %224 : vector<2x256xf32>
    %cst_51 = arith.constant 1.000000e+00 : f32
    %226 = vector.broadcast %cst_51 : f32 to vector<2x256xf32>
    %227 = arith.addf %226, %225 : vector<2x256xf32>
    %228 = arith.divf %226, %227 : vector<2x256xf32>
    %229 = math.tanh %223 : vector<2x256xf32>
    %230 = vector.extract_strided_slice %228 {offsets = [0, 64], sizes = [2, 64], strides = [1, 1]} : vector<2x256xf32> to vector<2x64xf32>
    %231 = arith.mulf %230, %217 : vector<2x64xf32>
    %232 = vector.extract_strided_slice %228 {offsets = [0, 0], sizes = [2, 64], strides = [1, 1]} : vector<2x256xf32> to vector<2x64xf32>
    %233 = vector.extract_strided_slice %229 {offsets = [0, 128], sizes = [2, 64], strides = [1, 1]} : vector<2x256xf32> to vector<2x64xf32>
    %234 = arith.mulf %232, %233 : vector<2x64xf32>
    %235 = arith.addf %231, %234 : vector<2x64xf32>
    %236 = vector.extract_strided_slice %228 {offsets = [0, 192], sizes = [2, 64], strides = [1, 1]} : vector<2x256xf32> to vector<2x64xf32>
    %237 = math.tanh %235 : vector<2x64xf32>
    %238 = arith.mulf %236, %237 : vector<2x64xf32>
    %c6 = arith.constant 6 : index
    %c0_52 = arith.constant 0 : index
    %239 = vector.load %arg11[%c6, %c0_52] : memref<16x64xf32, #tpu.memory_space<vmem>>, vector<2x64xf32>
    tpu.vector_store %arg11[%c6, %c0_52], %238 {strides = array<i32>} : memref<16x64xf32, #tpu.memory_space<vmem>>, vector<2x64xf32>,
    %cst_53 = arith.constant dense<0.000000e+00> : vector<2x256xf32>
    %240 = tpu.matmul %238, %159, %cst_53 {dimension_numbers = #tpu.dot_dimension_numbers<[1], [0], [0], [1], [0, 0, 1, 1], [], []>} : vector<2x64xf32>, vector<64x256xf32>, vector<2x256xf32> -> vector<2x256xf32>
    %241 = arith.addf %165, %240 : vector<2x256xf32>
    %242 = arith.negf %241 : vector<2x256xf32>
    %243 = math.exp %242 : vector<2x256xf32>
    %cst_54 = arith.constant 1.000000e+00 : f32
    %244 = vector.broadcast %cst_54 : f32 to vector<2x256xf32>
    %245 = arith.addf %244, %243 : vector<2x256xf32>
    %246 = arith.divf %244, %245 : vector<2x256xf32>
    %247 = math.tanh %241 : vector<2x256xf32>
    %248 = vector.extract_strided_slice %246 {offsets = [0, 64], sizes = [2, 64], strides = [1, 1]} : vector<2x256xf32> to vector<2x64xf32>
    %249 = arith.mulf %248, %235 : vector<2x64xf32>
    %250 = vector.extract_strided_slice %246 {offsets = [0, 0], sizes = [2, 64], strides = [1, 1]} : vector<2x256xf32> to vector<2x64xf32>
    %251 = vector.extract_strided_slice %247 {offsets = [0, 128], sizes = [2, 64], strides = [1, 1]} : vector<2x256xf32> to vector<2x64xf32>
    %252 = arith.mulf %250, %251 : vector<2x64xf32>
    %253 = arith.addf %249, %252 : vector<2x64xf32>
    %254 = vector.extract_strided_slice %246 {offsets = [0, 192], sizes = [2, 64], strides = [1, 1]} : vector<2x256xf32> to vector<2x64xf32>
    %255 = math.tanh %253 : vector<2x64xf32>
    %256 = arith.mulf %254, %255 : vector<2x64xf32>
    %c8 = arith.constant 8 : index
    %c0_55 = arith.constant 0 : index
    %257 = vector.load %arg11[%c8, %c0_55] : memref<16x64xf32, #tpu.memory_space<vmem>>, vector<2x64xf32>
    tpu.vector_store %arg11[%c8, %c0_55], %256 {strides = array<i32>} : memref<16x64xf32, #tpu.memory_space<vmem>>, vector<2x64xf32>,
    %cst_56 = arith.constant dense<0.000000e+00> : vector<2x256xf32>
    %258 = tpu.matmul %256, %159, %cst_56 {dimension_numbers = #tpu.dot_dimension_numbers<[1], [0], [0], [1], [0, 0, 1, 1], [], []>} : vector<2x64xf32>, vector<64x256xf32>, vector<2x256xf32> -> vector<2x256xf32>
    %259 = arith.addf %165, %258 : vector<2x256xf32>
    %260 = arith.negf %259 : vector<2x256xf32>
    %261 = math.exp %260 : vector<2x256xf32>
    %cst_57 = arith.constant 1.000000e+00 : f32
    %262 = vector.broadcast %cst_57 : f32 to vector<2x256xf32>
    %263 = arith.addf %262, %261 : vector<2x256xf32>
    %264 = arith.divf %262, %263 : vector<2x256xf32>
    %265 = math.tanh %259 : vector<2x256xf32>
    %266 = vector.extract_strided_slice %264 {offsets = [0, 64], sizes = [2, 64], strides = [1, 1]} : vector<2x256xf32> to vector<2x64xf32>
    %267 = arith.mulf %266, %253 : vector<2x64xf32>
    %268 = vector.extract_strided_slice %264 {offsets = [0, 0], sizes = [2, 64], strides = [1, 1]} : vector<2x256xf32> to vector<2x64xf32>
    %269 = vector.extract_strided_slice %265 {offsets = [0, 128], sizes = [2, 64], strides = [1, 1]} : vector<2x256xf32> to vector<2x64xf32>
    %270 = arith.mulf %268, %269 : vector<2x64xf32>
    %271 = arith.addf %267, %270 : vector<2x64xf32>
    %272 = vector.extract_strided_slice %264 {offsets = [0, 192], sizes = [2, 64], strides = [1, 1]} : vector<2x256xf32> to vector<2x64xf32>
    %273 = math.tanh %271 : vector<2x64xf32>
    %274 = arith.mulf %272, %273 : vector<2x64xf32>
    %c10 = arith.constant 10 : index
    %c0_58 = arith.constant 0 : index
    %275 = vector.load %arg11[%c10, %c0_58] : memref<16x64xf32, #tpu.memory_space<vmem>>, vector<2x64xf32>
    tpu.vector_store %arg11[%c10, %c0_58], %274 {strides = array<i32>} : memref<16x64xf32, #tpu.memory_space<vmem>>, vector<2x64xf32>,
    %cst_59 = arith.constant dense<0.000000e+00> : vector<2x256xf32>
    %276 = tpu.matmul %274, %159, %cst_59 {dimension_numbers = #tpu.dot_dimension_numbers<[1], [0], [0], [1], [0, 0, 1, 1], [], []>} : vector<2x64xf32>, vector<64x256xf32>, vector<2x256xf32> -> vector<2x256xf32>
    %277 = arith.addf %165, %276 : vector<2x256xf32>
    %278 = arith.negf %277 : vector<2x256xf32>
    %279 = math.exp %278 : vector<2x256xf32>
    %cst_60 = arith.constant 1.000000e+00 : f32
    %280 = vector.broadcast %cst_60 : f32 to vector<2x256xf32>
    %281 = arith.addf %280, %279 : vector<2x256xf32>
    %282 = arith.divf %280, %281 : vector<2x256xf32>
    %283 = math.tanh %277 : vector<2x256xf32>
    %284 = vector.extract_strided_slice %282 {offsets = [0, 64], sizes = [2, 64], strides = [1, 1]} : vector<2x256xf32> to vector<2x64xf32>
    %285 = arith.mulf %284, %271 : vector<2x64xf32>
    %286 = vector.extract_strided_slice %282 {offsets = [0, 0], sizes = [2, 64], strides = [1, 1]} : vector<2x256xf32> to vector<2x64xf32>
    %287 = vector.extract_strided_slice %283 {offsets = [0, 128], sizes = [2, 64], strides = [1, 1]} : vector<2x256xf32> to vector<2x64xf32>
    %288 = arith.mulf %286, %287 : vector<2x64xf32>
    %289 = arith.addf %285, %288 : vector<2x64xf32>
    %290 = vector.extract_strided_slice %282 {offsets = [0, 192], sizes = [2, 64], strides = [1, 1]} : vector<2x256xf32> to vector<2x64xf32>
    %291 = math.tanh %289 : vector<2x64xf32>
    %292 = arith.mulf %290, %291 : vector<2x64xf32>
    %c12 = arith.constant 12 : index
    %c0_61 = arith.constant 0 : index
    %293 = vector.load %arg11[%c12, %c0_61] : memref<16x64xf32, #tpu.memory_space<vmem>>, vector<2x64xf32>
    tpu.vector_store %arg11[%c12, %c0_61], %292 {strides = array<i32>} : memref<16x64xf32, #tpu.memory_space<vmem>>, vector<2x64xf32>,
    %cst_62 = arith.constant dense<0.000000e+00> : vector<2x256xf32>
    %294 = tpu.matmul %292, %159, %cst_62 {dimension_numbers = #tpu.dot_dimension_numbers<[1], [0], [0], [1], [0, 0, 1, 1], [], []>} : vector<2x64xf32>, vector<64x256xf32>, vector<2x256xf32> -> vector<2x256xf32>
    %295 = arith.addf %165, %294 : vector<2x256xf32>
    %296 = arith.negf %295 : vector<2x256xf32>
    %297 = math.exp %296 : vector<2x256xf32>
    %cst_63 = arith.constant 1.000000e+00 : f32
    %298 = vector.broadcast %cst_63 : f32 to vector<2x256xf32>
    %299 = arith.addf %298, %297 : vector<2x256xf32>
    %300 = arith.divf %298, %299 : vector<2x256xf32>
    %301 = math.tanh %295 : vector<2x256xf32>
    %302 = vector.extract_strided_slice %300 {offsets = [0, 64], sizes = [2, 64], strides = [1, 1]} : vector<2x256xf32> to vector<2x64xf32>
    %303 = arith.mulf %302, %289 : vector<2x64xf32>
    %304 = vector.extract_strided_slice %300 {offsets = [0, 0], sizes = [2, 64], strides = [1, 1]} : vector<2x256xf32> to vector<2x64xf32>
    %305 = vector.extract_strided_slice %301 {offsets = [0, 128], sizes = [2, 64], strides = [1, 1]} : vector<2x256xf32> to vector<2x64xf32>
    %306 = arith.mulf %304, %305 : vector<2x64xf32>
    %307 = arith.addf %303, %306 : vector<2x64xf32>
    %308 = vector.extract_strided_slice %300 {offsets = [0, 192], sizes = [2, 64], strides = [1, 1]} : vector<2x256xf32> to vector<2x64xf32>
    %309 = math.tanh %307 : vector<2x64xf32>
    %310 = arith.mulf %308, %309 : vector<2x64xf32>
    %c14 = arith.constant 14 : index
    %c0_64 = arith.constant 0 : index
    %311 = vector.load %arg11[%c14, %c0_64] : memref<16x64xf32, #tpu.memory_space<vmem>>, vector<2x64xf32>
    tpu.vector_store %arg11[%c14, %c0_64], %310 {strides = array<i32>} : memref<16x64xf32, #tpu.memory_space<vmem>>, vector<2x64xf32>,
    %c0_65 = arith.constant 0 : index
    %c0_66 = arith.constant 0 : index
    %312 = vector.load %arg11[%c0_65, %c0_66] : memref<16x64xf32, #tpu.memory_space<vmem>>, vector<16x64xf32>
    %c0_67 = arith.constant 0 : index
    %c0_68 = arith.constant 0 : index
    %313 = vector.load %arg7[%c0_67, %c0_68] : memref<64x32xf32, #tpu.memory_space<vmem>>, vector<64x32xf32>
    %cst_69 = arith.constant dense<0.000000e+00> : vector<16x32xf32>
    %314 = tpu.matmul %312, %313, %cst_69 {dimension_numbers = #tpu.dot_dimension_numbers<[1], [0], [0], [1], [0, 0, 1, 1], [], []>} : vector<16x64xf32>, vector<64x32xf32>, vector<16x32xf32> -> vector<16x32xf32>
    %c0_70 = arith.constant 0 : index
    %c0_71 = arith.constant 0 : index
    %315 = vector.load %arg8[%c0_70, %c0_71] : memref<1x32xf32, #tpu.memory_space<vmem>>, vector<1x32xf32>
    %316 = vector.broadcast %315 : vector<1x32xf32> to vector<16x32xf32>
    %317 = arith.addf %314, %316 : vector<16x32xf32>
    %c0_72 = arith.constant 0 : index
    %c0_73 = arith.constant 0 : index
    %318 = vector.load %arg10[%c0_72, %c0_73] : memref<16x32xf32, #tpu.memory_space<vmem>>, vector<16x32xf32>
    tpu.vector_store %arg10[%c0_72, %c0_73], %317 {strides = array<i32>} : memref<16x32xf32, #tpu.memory_space<vmem>>, vector<16x32xf32>,
    return
  }
}

</mosaic_0001>

<llo_original>
// kernel: lstm_ae_forward.1
$region0: #{lstm_ae_forward.1}
  #allocation0 [shape = 'u32[]', space=smem, size = 0x4, offset = 0x4, fixed_abs, tag = 'smem constant byte address 0x4 - core index']
  #allocation1 [shape = 'u32[144,128]{1,0:T(1,128)}', space=vmem, size = 0x12000, scoped, tag = 'internal scratch']
  #allocation2 [shape = 'f32[16,64]{1,0:T(8,128)}', space=vmem, size = 0x2000, scoped, tag = 'scratch operand']
  %s0 = inlined_call_operand.vmem [shape: f32[16,16], index: 0, kind: input, shape index: {}]
  %s1 = inlined_call_operand.hbm [shape: f32[16,128], index: 1, kind: input, shape index: {}]
  %s2 = inlined_call_operand.vmem [shape: f32[32,128], index: 2, kind: input, shape index: {}]
  %s3 = inlined_call_operand.hbm [shape: f32[1,128], index: 3, kind: input, shape index: {}]
  %s4 = inlined_call_operand.hbm [shape: f32[32,256], index: 4, kind: input, shape index: {}]
  %s5 = inlined_call_operand.vmem [shape: f32[1,64,256], index: 5, kind: input, shape index: {}]
  %s6 = inlined_call_operand.vmem [shape: f32[1,1,256], index: 6, kind: input, shape index: {}]
  %s7 = inlined_call_operand.vmem [shape: f32[64,32], index: 7, kind: input, shape index: {}]
  %s8 = inlined_call_operand.hbm [shape: f32[1,32], index: 8, kind: input, shape index: {}]
  %s9 = inlined_call_operand.hbm [shape: f32[2,32], index: 9, kind: output, shape index: {0}]
  %s10 = inlined_call_operand.vmem [shape: f32[16,32], index: 10, kind: output, shape index: {1}]
  %11 = xla_tuple %s9, %s10
  %s12 = sld [smem:[#allocation0]]
  $region70: #{lstm_ae_forward.1} parent=0
    _
  %s14 = ssub.s32 1, %s12
  %s15 = scalar_select 0, %s14, %s12
  $region1: #{lstm_ae_forward.1} parent=0
    #allocation3 [shape = 'u8[8192]{0}', space=vmem, size = 0x2000, scoped, tag = 'input window, operand 1, single buffered']
    #allocation4 [shape = 's32[1]{0}', space=sflag, size = 0x4, scoped, tag = 'scoped memory for lstm_ae_forward.1']
    #allocation5 [shape = 's32[1]{0}', space=sflag, size = 0x4, scoped, tag = 'scoped memory for lstm_ae_forward.1']
    #allocation6 [shape = 'u8[512]{0}', space=vmem, size = 0x400, scoped, tag = 'input window, operand 3, single buffered']
    #allocation7 [shape = 's32[1]{0}', space=sflag, size = 0x4, scoped, tag = 'scoped memory for lstm_ae_forward.1']
    #allocation8 [shape = 'u8[32768]{0}', space=vmem, size = 0x8000, scoped, tag = 'input window, operand 4, single buffered']
    #allocation9 [shape = 'u8[512]{0}', space=vmem, size = 0x400, scoped, tag = 'input window, operand 8, single buffered']
    #allocation10 [shape = 's32[1]{0}', space=sflag, size = 0x4, scoped, tag = 'scoped memory for lstm_ae_forward.1']
    #allocation11 [shape = 'u8[1024]{0}', space=vmem, size = 0x400, scoped, tag = 'output window, operand 0, single buffered']
    %16 = vsyncpa [#allocation4], 0
    %17 = vsyncpa [#allocation7], 0
    %18 = vsyncpa [#allocation10], 0
    %19 = vsyncpa [#allocation5], 0
    // Predicated region
    $region2: #{lstm_ae_forward.1} parent=1 // pred_check
      _
    $region3: #{lstm_ae_forward.1} parent=1 // pred_check_branch
      %21 = sbr.rel (0) target = $region5
    $region4: #{lstm_ae_forward.1} parent=1 // pred_region
      _
    $region5: #{lstm_ae_forward.1} parent=1 // pred_fallthru
      _
    // Predicated region
    $region6: #{lstm_ae_forward.1} parent=1 // pred_check
      _
    $region7: #{lstm_ae_forward.1} parent=1 // pred_check_branch
      %23 = sbr.rel (0) target = $region9
    $region8: #{lstm_ae_forward.1} parent=1 // pred_region
      %s25 = ssub.s32 256, 256
      %26 = vsyncadd [#allocation4], %s25
      %s27 = sshll.u32 [#allocation3], 4
      %s28 = int_to_ptr.vmem [resolvable:$true] %s27
      %33 = dma.hbm_to_vmem [thread:$0]  %s1, 256, %s28, [#allocation4], 128, 128, 8
    $region9: #{lstm_ae_forward.1} parent=1 // pred_fallthru
      _
    // Predicated region
    $region10: #{lstm_ae_forward.1} parent=1 // pred_check
      _
    $region11: #{lstm_ae_forward.1} parent=1 // pred_check_branch
      %35 = sbr.rel (0) target = $region13
    $region12: #{lstm_ae_forward.1} parent=1 // pred_region
      _
    $region13: #{lstm_ae_forward.1} parent=1 // pred_fallthru
      _
    // Predicated region
    $region14: #{lstm_ae_forward.1} parent=1 // pred_check
      _
    $region15: #{lstm_ae_forward.1} parent=1 // pred_check_branch
      %37 = sbr.rel (0) target = $region17
    $region16: #{lstm_ae_forward.1} parent=1 // pred_region
      %s39 = ssub.s32 16, 16
      %40 = vsyncadd [#allocation7], %s39
      %s42 = sshll.u32 [#allocation6], 4
      %s43 = int_to_ptr.vmem [resolvable:$true] %s42
      %45 = dma.hbm_to_vmem [thread:$0]  %s3, 16, %s43, [#allocation7]
    $region17: #{lstm_ae_forward.1} parent=1 // pred_fallthru
      _
    // Predicated region
    $region18: #{lstm_ae_forward.1} parent=1 // pred_check
      _
    $region19: #{lstm_ae_forward.1} parent=1 // pred_check_branch
      %47 = sbr.rel (0) target = $region21
    $region20: #{lstm_ae_forward.1} parent=1 // pred_region
      %s49 = ssub.s32 1024, 1024
      %50 = vsyncadd [#allocation7], %s49
      %s51 = sshll.u32 [#allocation8], 4
      %s52 = int_to_ptr.vmem [resolvable:$true] %s51
      %57 = dma.hbm_to_vmem [thread:$0]  %s4, 1024, %s52, [#allocation7], 256, 256, 16
    $region21: #{lstm_ae_forward.1} parent=1 // pred_fallthru
      _
    // Predicated region
    $region22: #{lstm_ae_forward.1} parent=1 // pred_check
      _
    $region23: #{lstm_ae_forward.1} parent=1 // pred_check_branch
      %59 = sbr.rel (0) target = $region25
    $region24: #{lstm_ae_forward.1} parent=1 // pred_region
      _
    $region25: #{lstm_ae_forward.1} parent=1 // pred_fallthru
      _
    // Predicated region
    $region26: #{lstm_ae_forward.1} parent=1 // pred_check
      _
    $region27: #{lstm_ae_forward.1} parent=1 // pred_check_branch
      %61 = sbr.rel (0) target = $region29
    $region28: #{lstm_ae_forward.1} parent=1 // pred_region
      _
    $region29: #{lstm_ae_forward.1} parent=1 // pred_fallthru
      _
    // Predicated region
    $region30: #{lstm_ae_forward.1} parent=1 // pred_check
      _
    $region31: #{lstm_ae_forward.1} parent=1 // pred_check_branch
      %63 = sbr.rel (0) target = $region33
    $region32: #{lstm_ae_forward.1} parent=1 // pred_region
      _
    $region33: #{lstm_ae_forward.1} parent=1 // pred_fallthru
      _
    // Predicated region
    $region34: #{lstm_ae_forward.1} parent=1 // pred_check
      _
    $region35: #{lstm_ae_forward.1} parent=1 // pred_check_branch
      %65 = sbr.rel (0) target = $region37
    $region36: #{lstm_ae_forward.1} parent=1 // pred_region
      %s67 = ssub.s32 16, 16
      %68 = vsyncadd [#allocation10], %s67
      %s70 = sshll.u32 [#allocation9], 4
      %s71 = int_to_ptr.vmem [resolvable:$true] %s70
      %73 = dma.hbm_to_vmem [thread:$0]  %s8, 16, %s71, [#allocation10]
    $region37: #{lstm_ae_forward.1} parent=1 // pred_fallthru
      _
    // Predicated region
    $region38: #{lstm_ae_forward.1} parent=1 // pred_check
      _
    $region39: #{lstm_ae_forward.1} parent=1 // pred_check_branch
      %75 = sbr.rel (0) target = $region41
    $region40: #{lstm_ae_forward.1} parent=1 // pred_region
      %76 = dma.done [#allocation4], 256
    $region41: #{lstm_ae_forward.1} parent=1 // pred_fallthru
      _
    // Predicated region
    $region42: #{lstm_ae_forward.1} parent=1 // pred_check
      _
    $region43: #{lstm_ae_forward.1} parent=1 // pred_check_branch
      %78 = sbr.rel (0) target = $region45
    $region44: #{lstm_ae_forward.1} parent=1 // pred_region
      %79 = dma.done [#allocation7], 16
    $region45: #{lstm_ae_forward.1} parent=1 // pred_fallthru
      _
    // Predicated region
    $region46: #{lstm_ae_forward.1} parent=1 // pred_check
      _
    $region47: #{lstm_ae_forward.1} parent=1 // pred_check_branch
      %81 = sbr.rel (0) target = $region49
    $region48: #{lstm_ae_forward.1} parent=1 // pred_region
      %82 = dma.done [#allocation7], 1024
    $region49: #{lstm_ae_forward.1} parent=1 // pred_fallthru
      _
    // Predicated region
    $region50: #{lstm_ae_forward.1} parent=1 // pred_check
      _
    $region51: #{lstm_ae_forward.1} parent=1 // pred_check_branch
      %84 = sbr.rel (0) target = $region53
    $region52: #{lstm_ae_forward.1} parent=1 // pred_region
      %85 = dma.done [#allocation10], 16
    $region53: #{lstm_ae_forward.1} parent=1 // pred_fallthru
      _
    %v86 = vld [vmem:[%s0] sm:$0xff]
    %v87 = vld [vmem:[%s0 + $0x8] sm:$0xff]
    %v88 = vld [vmem:[#allocation3] sm:$0xff]
    %v89 = vld [vmem:[#allocation3 + $0x8] sm:$0xff]
    %v90 = vld [vmem:[%s2] sm:$0xff]
    %v91 = vld [vmem:[%s2 + $0x8] sm:$0xff]
    %v92 = vld [vmem:[%s2 + $0x10] sm:$0xff]
    %v93 = vld [vmem:[%s2 + $0x18] sm:$0xff]
    %v94 = vld [vmem:[#allocation6] sm:$0x1]
    %v96 = vlaneseq
    %v97 = vshrl.u32 %v96, 7
    %v98 = vsub.s32 0, %v97
    %v99 = vrot.slane %v94, %v98
    %vm101 = vcmask 130048
    %v103 = vsel %vm101, %v86, 0
    %v106 = vsel %vm101, %v87, 0
    %108 = vmatprep.subr.mxu0 0.0
    %109 = vmatpush1.msra.mxu0 %v88
    %110 = vmatprep.subr.mxu0 0.0
    %111 = vmatpush1.msra.mxu0 %v89
    %112 = vmatprep.subr.mxu0 0.0
    %113 = vmatpush1.msra.mxu0 0.0
    %114 = vmatprep.subr.mxu0 0.0
    %115 = vmatpush1.msra.mxu0 0.0
    %116 = vmatprep.subr.mxu0 0.0
    %117 = vmatpush1.msra.mxu0 0.0
    %118 = vmatprep.subr.mxu0 0.0
    %119 = vmatpush1.msra.mxu0 0.0
    %120 = vmatprep.subr.mxu0 0.0
    %121 = vmatpush1.msra.mxu0 0.0
    %122 = vmatprep.subr.mxu0 0.0
    %123 = vmatpush1.msra.mxu0 0.0
    %124 = vmatprep.subr.mxu0 0.0
    %125 = vmatpush1.msra.mxu0 0.0
    %126 = vmatprep.subr.mxu0 0.0
    %127 = vmatpush1.msra.mxu0 0.0
    %128 = vmatprep.subr.mxu0 0.0
    %129 = vmatpush1.msra.mxu0 0.0
    %130 = vmatprep.subr.mxu0 0.0
    %131 = vmatpush1.msra.mxu0 0.0
    %132 = vmatprep.subr.mxu0 0.0
    %133 = vmatpush1.msra.mxu0 0.0
    %134 = vmatprep.subr.mxu0 0.0
    %135 = vmatpush1.msra.mxu0 0.0
    %136 = vmatprep.subr.mxu0 0.0
    %137 = vmatpush1.msra.mxu0 0.0
    %138 = vmatprep.subr.mxu0 0.0
    %139 = vmatpush1.msra.mxu0 0.0
    %140 = vmatprep.subr.mxu0 0.0
    %141 = vmatpush1.msra.mxu0 0.0
    %142 = vmatprep.subr.mxu0 0.0
    %143 = vmatpush1.msra.mxu0 0.0
    %144 = vmatprep.subr.mxu0 0.0
    %145 = vmatpush1.msra.mxu0 0.0
    %146 = vmatprep.subr.mxu0 0.0
    %147 = vmatpush1.msra.mxu0 0.0
    %148 = vmatprep.subr.mxu0 0.0
    %149 = vmatpush1.msra.mxu0 0.0
    %150 = vmatprep.subr.mxu0 0.0
    %151 = vmatpush1.msra.mxu0 0.0
    %152 = vmatprep.subr.mxu0 0.0
    %153 = vmatpush1.msra.mxu0 0.0
    %154 = vmatprep.subr.mxu0 0.0
    %155 = vmatpush1.msra.mxu0 0.0
    %156 = vmatprep.subr.mxu0 0.0
    %157 = vmatpush1.msra.mxu0 0.0
    %158 = vmatprep.subr.mxu0 0.0
    %159 = vmatpush1.msra.mxu0 0.0
    %160 = vmatprep.subr.mxu0 0.0
    %161 = vmatpush1.msra.mxu0 0.0
    %162 = vmatprep.subr.mxu0 0.0
    %163 = vmatpush1.msra.mxu0 0.0
    %164 = vmatprep.subr.mxu0 0.0
    %165 = vmatpush1.msra.mxu0 0.0
    %166 = vmatprep.subr.mxu0 0.0
    %167 = vmatpush1.msra.mxu0 0.0
    %168 = vmatprep.subr.mxu0 0.0
    %169 = vmatpush1.msra.mxu0 0.0
    %170 = vmatprep.subr.mxu0 0.0
    %171 = vmatpush1.msra.mxu0 0.0
    %172 = vmatprep.mubr.f32.mxu0 0.0
    %173 = vmatmul.mubr.f32.gmra.mrb[0].mxu0 %v103
    %v174 = vpop.f32.mrb[0].mxu0
    %v175 = vadd.f32 %v99, %v174
    %v176 = vpop.f32.mrb[0].mxu0
    %177 = vmatprep.mubr.f32.mxu0 0.0
    %178 = vmatmul.mubr.f32.gmra.mrb[0].mxu0 %v106
    %v179 = vpop.f32.mrb[0].mxu0
    %v180 = vadd.f32 %v99, %v179
    %v181 = vpop.f32.mrb[0].mxu0
    %182 = vdwg.mxu0
    %vm183 = vcmask 261120
    %v185 = vsel %vm183, 0.0, 0
    %187 = vmatprep.subr.mxu0 0.0
    %188 = vmatpush1.msra.mxu0 %v90
    %189 = vmatprep.subr.mxu0 0.0
    %190 = vmatpush1.msra.mxu0 %v91
    %191 = vmatprep.subr.mxu0 0.0
    %192 = vmatpush1.msra.mxu0 %v92
    %193 = vmatprep.subr.mxu0 0.0
    %194 = vmatpush1.msra.mxu0 %v93
    %195 = vmatprep.subr.mxu0 0.0
    %196 = vmatpush1.msra.mxu0 0.0
    %197 = vmatprep.subr.mxu0 0.0
    %198 = vmatpush1.msra.mxu0 0.0
    %199 = vmatprep.subr.mxu0 0.0
    %200 = vmatpush1.msra.mxu0 0.0
    %201 = vmatprep.subr.mxu0 0.0
    %202 = vmatpush1.msra.mxu0 0.0
    %203 = vmatprep.subr.mxu0 0.0
    %204 = vmatpush1.msra.mxu0 0.0
    %205 = vmatprep.subr.mxu0 0.0
    %206 = vmatpush1.msra.mxu0 0.0
    %207 = vmatprep.subr.mxu0 0.0
    %208 = vmatpush1.msra.mxu0 0.0
    %209 = vmatprep.subr.mxu0 0.0
    %210 = vmatpush1.msra.mxu0 0.0
    %211 = vmatprep.subr.mxu0 0.0
    %212 = vmatpush1.msra.mxu0 0.0
    %213 = vmatprep.subr.mxu0 0.0
    %214 = vmatpush1.msra.mxu0 0.0
    %215 = vmatprep.subr.mxu0 0.0
    %216 = vmatpush1.msra.mxu0 0.0
    %217 = vmatprep.subr.mxu0 0.0
    %218 = vmatpush1.msra.mxu0 0.0
    %219 = vmatprep.subr.mxu0 0.0
    %220 = vmatpush1.msra.mxu0 0.0
    %221 = vmatprep.subr.mxu0 0.0
    %222 = vmatpush1.msra.mxu0 0.0
    %223 = vmatprep.subr.mxu0 0.0
    %224 = vmatpush1.msra.mxu0 0.0
    %225 = vmatprep.subr.mxu0 0.0
    %226 = vmatpush1.msra.mxu0 0.0
    %227 = vmatprep.subr.mxu0 0.0
    %228 = vmatpush1.msra.mxu0 0.0
    %229 = vmatprep.subr.mxu0 0.0
    %230 = vmatpush1.msra.mxu0 0.0
    %231 = vmatprep.subr.mxu0 0.0
    %232 = vmatpush1.msra.mxu0 0.0
    %233 = vmatprep.subr.mxu0 0.0
    %234 = vmatpush1.msra.mxu0 0.0
    %235 = vmatprep.subr.mxu0 0.0
    %236 = vmatpush1.msra.mxu0 0.0
    %237 = vmatprep.subr.mxu0 0.0
    %238 = vmatpush1.msra.mxu0 0.0
    %239 = vmatprep.subr.mxu0 0.0
    %240 = vmatpush1.msra.mxu0 0.0
    %241 = vmatprep.subr.mxu0 0.0
    %242 = vmatpush1.msra.mxu0 0.0
    %243 = vmatprep.subr.mxu0 0.0
    %244 = vmatpush1.msra.mxu0 0.0
    %245 = vmatprep.subr.mxu0 0.0
    %246 = vmatpush1.msra.mxu0 0.0
    %247 = vmatprep.subr.mxu0 0.0
    %248 = vmatpush1.msra.mxu0 0.0
    %249 = vmatprep.subr.mxu0 0.0
    %250 = vmatpush1.msra.mxu0 0.0
    %251 = vmatprep.mubr.f32.mxu0 0.0
    %252 = vmatmul.mubr.f32.gmra.mrb[0].mxu0 %v185
    %v253 = vpop.f32.mrb[0].mxu0
    %v254 = vadd.f32 0.0, %v253
    %v255 = vpop.f32.mrb[0].mxu0
    %256 = vdwg.mxu0
    %v257 = vadd.f32 %v175, %v254
    %v258 = vxor.u32 %v257, 2147483648
    %v259 = vmul.f32 %v258, 1.442695
    %v260 = vpow.pop %v259
    %v261 = vadd.f32 %v260, 1.0
    %v262 = vrcp.pop %v261
    %v263 = vmul.f32 1.0, %v262
    %v264 = vtanh.pop %v257
    %v265 = vmul.f32 %v263, 0.0
    %267 = vrot.lane.b32.xlu0 %v264, 64
    %v268 = vpop.permute.xlu0 %267
    %v270 = vmul.f32 %v263, %v268
    %272 = vrot.lane.b32.xlu0 %v270, 32
    %v273 = vpop.permute.xlu0 %272
    %v275 = vadd.f32 %v265, %v273
    %v276 = vtanh.pop %v275
    %278 = vrot.lane.b32.xlu0 %v276, 64
    %v279 = vpop.permute.xlu0 %278
    %v281 = vmul.f32 %v263, %v279
    %283 = vrot.lane.b32.xlu0 %v281, 32
    %v284 = vpop.permute.xlu0 %283
    %v285 = vsel %vm183, %v284, 0
    %287 = vmatprep.subr.mxu0 0.0
    %288 = vmatpush1.msra.mxu0 %v90
    %289 = vmatprep.subr.mxu0 0.0
    %290 = vmatpush1.msra.mxu0 %v91
    %291 = vmatprep.subr.mxu0 0.0
    %292 = vmatpush1.msra.mxu0 %v92
    %293 = vmatprep.subr.mxu0 0.0
    %294 = vmatpush1.msra.mxu0 %v93
    %295 = vmatprep.subr.mxu0 0.0
    %296 = vmatpush1.msra.mxu0 0.0
    %297 = vmatprep.subr.mxu0 0.0
    %298 = vmatpush1.msra.mxu0 0.0
    %299 = vmatprep.subr.mxu0 0.0
    %300 = vmatpush1.msra.mxu0 0.0
    %301 = vmatprep.subr.mxu0 0.0
    %302 = vmatpush1.msra.mxu0 0.0
    %303 = vmatprep.subr.mxu0 0.0
    %304 = vmatpush1.msra.mxu0 0.0
    %305 = vmatprep.subr.mxu0 0.0
    %306 = vmatpush1.msra.mxu0 0.0
    %307 = vmatprep.subr.mxu0 0.0
    %308 = vmatpush1.msra.mxu0 0.0
    %309 = vmatprep.subr.mxu0 0.0
    %310 = vmatpush1.msra.mxu0 0.0
    %311 = vmatprep.subr.mxu0 0.0
    %312 = vmatpush1.msra.mxu0 0.0
    %313 = vmatprep.subr.mxu0 0.0
    %314 = vmatpush1.msra.mxu0 0.0
    %315 = vmatprep.subr.mxu0 0.0
    %316 = vmatpush1.msra.mxu0 0.0
    %317 = vmatprep.subr.mxu0 0.0
    %318 = vmatpush1.msra.mxu0 0.0
    %319 = vmatprep.subr.mxu0 0.0
    %320 = vmatpush1.msra.mxu0 0.0
    %321 = vmatprep.subr.mxu0 0.0
    %322 = vmatpush1.msra.mxu0 0.0
    %323 = vmatprep.subr.mxu0 0.0
    %324 = vmatpush1.msra.mxu0 0.0
    %325 = vmatprep.subr.mxu0 0.0
    %326 = vmatpush1.msra.mxu0 0.0
    %327 = vmatprep.subr.mxu0 0.0
    %328 = vmatpush1.msra.mxu0 0.0
    %329 = vmatprep.subr.mxu0 0.0
    %330 = vmatpush1.msra.mxu0 0.0
    %331 = vmatprep.subr.mxu0 0.0
    %332 = vmatpush1.msra.mxu0 0.0
    %333 = vmatprep.subr.mxu0 0.0
    %334 = vmatpush1.msra.mxu0 0.0
    %335 = vmatprep.subr.mxu0 0.0
    %336 = vmatpush1.msra.mxu0 0.0
    %337 = vmatprep.subr.mxu0 0.0
    %338 = vmatpush1.msra.mxu0 0.0
    %339 = vmatprep.subr.mxu0 0.0
    %340 = vmatpush1.msra.mxu0 0.0
    %341 = vmatprep.subr.mxu0 0.0
    %342 = vmatpush1.msra.mxu0 0.0
    %343 = vmatprep.subr.mxu0 0.0
    %344 = vmatpush1.msra.mxu0 0.0
    %345 = vmatprep.subr.mxu0 0.0
    %346 = vmatpush1.msra.mxu0 0.0
    %347 = vmatprep.subr.mxu0 0.0
    %348 = vmatpush1.msra.mxu0 0.0
    %349 = vmatprep.subr.mxu0 0.0
    %350 = vmatpush1.msra.mxu0 0.0
    %351 = vmatprep.mubr.f32.mxu0 0.0
    %352 = vmatmul.mubr.f32.gmra.mrb[0].mxu0 %v285
    %v353 = vpop.f32.mrb[0].mxu0
    %v354 = vadd.f32 0.0, %v353
    %v355 = vpop.f32.mrb[0].mxu0
    %356 = vdwg.mxu0
    %v358 = vrot.slane %v354, 6
    %v360 = vadd.f32 %v175, %v358
    %v361 = vxor.u32 %v360, 2147483648
    %v362 = vmul.f32 %v361, 1.442695
    %v363 = vpow.pop %v362
    %v364 = vadd.f32 %v363, 1.0
    %v365 = vrcp.pop %v364
    %v366 = vmul.f32 1.0, %v365
    %v367 = vtanh.pop %v360
    %v369 = vrot.slane %v275, 6
    %v371 = vmul.f32 %v366, %v369
    %373 = vrot.lane.b32.xlu0 %v367, 64
    %v374 = vpop.permute.xlu0 %373
    %v376 = vmul.f32 %v366, %v374
    %378 = vrot.lane.b32.xlu0 %v376, 32
    %v379 = vpop.permute.xlu0 %378
    %v381 = vadd.f32 %v371, %v379
    %v382 = vtanh.pop %v381
    %384 = vrot.lane.b32.xlu0 %v382, 64
    %v385 = vpop.permute.xlu0 %384
    %v387 = vmul.f32 %v366, %v385
    %v389 = vrot.slane %v387, 2
    %390 = vrot.lane.b32.xlu0 %v389, 32
    %v391 = vpop.permute.xlu0 %390
    %v392 = vsel %vm183, %v391, 0
    %394 = vmatprep.subr.mxu0 0.0
    %395 = vmatpush1.msra.mxu0 %v90
    %396 = vmatprep.subr.mxu0 0.0
    %397 = vmatpush1.msra.mxu0 %v91
    %398 = vmatprep.subr.mxu0 0.0
    %399 = vmatpush1.msra.mxu0 %v92
    %400 = vmatprep.subr.mxu0 0.0
    %401 = vmatpush1.msra.mxu0 %v93
    %402 = vmatprep.subr.mxu0 0.0
    %403 = vmatpush1.msra.mxu0 0.0
    %404 = vmatprep.subr.mxu0 0.0
    %405 = vmatpush1.msra.mxu0 0.0
    %406 = vmatprep.subr.mxu0 0.0
    %407 = vmatpush1.msra.mxu0 0.0
    %408 = vmatprep.subr.mxu0 0.0
    %409 = vmatpush1.msra.mxu0 0.0
    %410 = vmatprep.subr.mxu0 0.0
    %411 = vmatpush1.msra.mxu0 0.0
    %412 = vmatprep.subr.mxu0 0.0
    %413 = vmatpush1.msra.mxu0 0.0
    %414 = vmatprep.subr.mxu0 0.0
    %415 = vmatpush1.msra.mxu0 0.0
    %416 = vmatprep.subr.mxu0 0.0
    %417 = vmatpush1.msra.mxu0 0.0
    %418 = vmatprep.subr.mxu0 0.0
    %419 = vmatpush1.msra.mxu0 0.0
    %420 = vmatprep.subr.mxu0 0.0
    %421 = vmatpush1.msra.mxu0 0.0
    %422 = vmatprep.subr.mxu0 0.0
    %423 = vmatpush1.msra.mxu0 0.0
    %424 = vmatprep.subr.mxu0 0.0
    %425 = vmatpush1.msra.mxu0 0.0
    %426 = vmatprep.subr.mxu0 0.0
    %427 = vmatpush1.msra.mxu0 0.0
    %428 = vmatprep.subr.mxu0 0.0
    %429 = vmatpush1.msra.mxu0 0.0
    %430 = vmatprep.subr.mxu0 0.0
    %431 = vmatpush1.msra.mxu0 0.0
    %432 = vmatprep.subr.mxu0 0.0
    %433 = vmatpush1.msra.mxu0 0.0
    %434 = vmatprep.subr.mxu0 0.0
    %435 = vmatpush1.msra.mxu0 0.0
    %436 = vmatprep.subr.mxu0 0.0
    %437 = vmatpush1.msra.mxu0 0.0
    %438 = vmatprep.subr.mxu0 0.0
    %439 = vmatpush1.msra.mxu0 0.0
    %440 = vmatprep.subr.mxu0 0.0
    %441 = vmatpush1.msra.mxu0 0.0
    %442 = vmatprep.subr.mxu0 0.0
    %443 = vmatpush1.msra.mxu0 0.0
    %444 = vmatprep.subr.mxu0 0.0
    %445 = vmatpush1.msra.mxu0 0.0
    %446 = vmatprep.subr.mxu0 0.0
    %447 = vmatpush1.msra.mxu0 0.0
    %448 = vmatprep.subr.mxu0 0.0
    %449 = vmatpush1.msra.mxu0 0.0
    %450 = vmatprep.subr.mxu0 0.0
    %451 = vmatpush1.msra.mxu0 0.0
    %452 = vmatprep.subr.mxu0 0.0
    %453 = vmatpush1.msra.mxu0 0.0
    %454 = vmatprep.subr.mxu0 0.0
    %455 = vmatpush1.msra.mxu0 0.0
    %456 = vmatprep.subr.mxu0 0.0
    %457 = vmatpush1.msra.mxu0 0.0
    %458 = vmatprep.mubr.f32.mxu0 0.0
    %459 = vmatmul.mubr.f32.gmra.mrb[0].mxu0 %v392
    %v460 = vpop.f32.mrb[0].mxu0
    %v461 = vadd.f32 0.0, %v460
    %v462 = vpop.f32.mrb[0].mxu0
    %463 = vdwg.mxu0
    %v465 = vrot.slane %v461, 4
    %v467 = vadd.f32 %v175, %v465
    %v468 = vxor.u32 %v467, 2147483648
    %v469 = vmul.f32 %v468, 1.442695
    %v470 = vpow.pop %v469
    %v471 = vadd.f32 %v470, 1.0
    %v472 = vrcp.pop %v471
    %v473 = vmul.f32 1.0, %v472
    %v474 = vtanh.pop %v467
    %v476 = vrot.slane %v381, 6
    %v478 = vmul.f32 %v473, %v476
    %480 = vrot.lane.b32.xlu0 %v474, 64
    %v481 = vpop.permute.xlu0 %480
    %v483 = vmul.f32 %v473, %v481
    %485 = vrot.lane.b32.xlu0 %v483, 32
    %v486 = vpop.permute.xlu0 %485
    %v488 = vadd.f32 %v478, %v486
    %v489 = vtanh.pop %v488
    %491 = vrot.lane.b32.xlu0 %v489, 64
    %v492 = vpop.permute.xlu0 %491
    %v494 = vmul.f32 %v473, %v492
    %v496 = vrot.slane %v494, 4
    %497 = vrot.lane.b32.xlu0 %v496, 32
    %v498 = vpop.permute.xlu0 %497
    %v499 = vsel %vm183, %v498, 0
    %501 = vmatprep.subr.mxu0 0.0
    %502 = vmatpush1.msra.mxu0 %v90
    %503 = vmatprep.subr.mxu0 0.0
    %504 = vmatpush1.msra.mxu0 %v91
    %505 = vmatprep.subr.mxu0 0.0
    %506 = vmatpush1.msra.mxu0 %v92
    %507 = vmatprep.subr.mxu0 0.0
    %508 = vmatpush1.msra.mxu0 %v93
    %509 = vmatprep.subr.mxu0 0.0
    %510 = vmatpush1.msra.mxu0 0.0
    %511 = vmatprep.subr.mxu0 0.0
    %512 = vmatpush1.msra.mxu0 0.0
    %513 = vmatprep.subr.mxu0 0.0
    %514 = vmatpush1.msra.mxu0 0.0
    %515 = vmatprep.subr.mxu0 0.0
    %516 = vmatpush1.msra.mxu0 0.0
    %517 = vmatprep.subr.mxu0 0.0
    %518 = vmatpush1.msra.mxu0 0.0
    %519 = vmatprep.subr.mxu0 0.0
    %520 = vmatpush1.msra.mxu0 0.0
    %521 = vmatprep.subr.mxu0 0.0
    %522 = vmatpush1.msra.mxu0 0.0
    %523 = vmatprep.subr.mxu0 0.0
    %524 = vmatpush1.msra.mxu0 0.0
    %525 = vmatprep.subr.mxu0 0.0
    %526 = vmatpush1.msra.mxu0 0.0
    %527 = vmatprep.subr.mxu0 0.0
    %528 = vmatpush1.msra.mxu0 0.0
    %529 = vmatprep.subr.mxu0 0.0
    %530 = vmatpush1.msra.mxu0 0.0
    %531 = vmatprep.subr.mxu0 0.0
    %532 = vmatpush1.msra.mxu0 0.0
    %533 = vmatprep.subr.mxu0 0.0
    %534 = vmatpush1.msra.mxu0 0.0
    %535 = vmatprep.subr.mxu0 0.0
    %536 = vmatpush1.msra.mxu0 0.0
    %537 = vmatprep.subr.mxu0 0.0
    %538 = vmatpush1.msra.mxu0 0.0
    %539 = vmatprep.subr.mxu0 0.0
    %540 = vmatpush1.msra.mxu0 0.0
    %541 = vmatprep.subr.mxu0 0.0
    %542 = vmatpush1.msra.mxu0 0.0
    %543 = vmatprep.subr.mxu0 0.0
    %544 = vmatpush1.msra.mxu0 0.0
    %545 = vmatprep.subr.mxu0 0.0
    %546 = vmatpush1.msra.mxu0 0.0
    %547 = vmatprep.subr.mxu0 0.0
    %548 = vmatpush1.msra.mxu0 0.0
    %549 = vmatprep.subr.mxu0 0.0
    %550 = vmatpush1.msra.mxu0 0.0
    %551 = vmatprep.subr.mxu0 0.0
    %552 = vmatpush1.msra.mxu0 0.0
    %553 = vmatprep.subr.mxu0 0.0
    %554 = vmatpush1.msra.mxu0 0.0
    %555 = vmatprep.subr.mxu0 0.0
    %556 = vmatpush1.msra.mxu0 0.0
    %557 = vmatprep.subr.mxu0 0.0
    %558 = vmatpush1.msra.mxu0 0.0
    %559 = vmatprep.subr.mxu0 0.0
    %560 = vmatpush1.msra.mxu0 0.0
    %561 = vmatprep.subr.mxu0 0.0
    %562 = vmatpush1.msra.mxu0 0.0
    %563 = vmatprep.subr.mxu0 0.0
    %564 = vmatpush1.msra.mxu0 0.0
    %565 = vmatprep.mubr.f32.mxu0 0.0
    %566 = vmatmul.mubr.f32.gmra.mrb[0].mxu0 %v499
    %v567 = vpop.f32.mrb[0].mxu0
    %v568 = vadd.f32 0.0, %v567
    %v569 = vpop.f32.mrb[0].mxu0
    %570 = vdwg.mxu0
    %v572 = vrot.slane %v568, 2
    %v574 = vadd.f32 %v175, %v572
    %v575 = vxor.u32 %v574, 2147483648
    %v576 = vmul.f32 %v575, 1.442695
    %v577 = vpow.pop %v576
    %v578 = vadd.f32 %v577, 1.0
    %v579 = vrcp.pop %v578
    %v580 = vmul.f32 1.0, %v579
    %v581 = vtanh.pop %v574
    %v583 = vrot.slane %v488, 6
    %v585 = vmul.f32 %v580, %v583
    %587 = vrot.lane.b32.xlu0 %v581, 64
    %v588 = vpop.permute.xlu0 %587
    %v590 = vmul.f32 %v580, %v588
    %592 = vrot.lane.b32.xlu0 %v590, 32
    %v593 = vpop.permute.xlu0 %592
    %v595 = vadd.f32 %v585, %v593
    %v596 = vtanh.pop %v595
    %598 = vrot.lane.b32.xlu0 %v596, 64
    %v599 = vpop.permute.xlu0 %598
    %v601 = vmul.f32 %v580, %v599
    %v603 = vrot.slane %v601, 6
    %604 = vrot.lane.b32.xlu0 %v603, 32
    %v605 = vpop.permute.xlu0 %604
    %v606 = vsel %vm183, %v605, 0
    %608 = vmatprep.subr.mxu0 0.0
    %609 = vmatpush1.msra.mxu0 %v90
    %610 = vmatprep.subr.mxu0 0.0
    %611 = vmatpush1.msra.mxu0 %v91
    %612 = vmatprep.subr.mxu0 0.0
    %613 = vmatpush1.msra.mxu0 %v92
    %614 = vmatprep.subr.mxu0 0.0
    %615 = vmatpush1.msra.mxu0 %v93
    %616 = vmatprep.subr.mxu0 0.0
    %617 = vmatpush1.msra.mxu0 0.0
    %618 = vmatprep.subr.mxu0 0.0
    %619 = vmatpush1.msra.mxu0 0.0
    %620 = vmatprep.subr.mxu0 0.0
    %621 = vmatpush1.msra.mxu0 0.0
    %622 = vmatprep.subr.mxu0 0.0
    %623 = vmatpush1.msra.mxu0 0.0
    %624 = vmatprep.subr.mxu0 0.0
    %625 = vmatpush1.msra.mxu0 0.0
    %626 = vmatprep.subr.mxu0 0.0
    %627 = vmatpush1.msra.mxu0 0.0
    %628 = vmatprep.subr.mxu0 0.0
    %629 = vmatpush1.msra.mxu0 0.0
    %630 = vmatprep.subr.mxu0 0.0
    %631 = vmatpush1.msra.mxu0 0.0
    %632 = vmatprep.subr.mxu0 0.0
    %633 = vmatpush1.msra.mxu0 0.0
    %634 = vmatprep.subr.mxu0 0.0
    %635 = vmatpush1.msra.mxu0 0.0
    %636 = vmatprep.subr.mxu0 0.0
    %637 = vmatpush1.msra.mxu0 0.0
    %638 = vmatprep.subr.mxu0 0.0
    %639 = vmatpush1.msra.mxu0 0.0
    %640 = vmatprep.subr.mxu0 0.0
    %641 = vmatpush1.msra.mxu0 0.0
    %642 = vmatprep.subr.mxu0 0.0
    %643 = vmatpush1.msra.mxu0 0.0
    %644 = vmatprep.subr.mxu0 0.0
    %645 = vmatpush1.msra.mxu0 0.0
    %646 = vmatprep.subr.mxu0 0.0
    %647 = vmatpush1.msra.mxu0 0.0
    %648 = vmatprep.subr.mxu0 0.0
    %649 = vmatpush1.msra.mxu0 0.0
    %650 = vmatprep.subr.mxu0 0.0
    %651 = vmatpush1.msra.mxu0 0.0
    %652 = vmatprep.subr.mxu0 0.0
    %653 = vmatpush1.msra.mxu0 0.0
    %654 = vmatprep.subr.mxu0 0.0
    %655 = vmatpush1.msra.mxu0 0.0
    %656 = vmatprep.subr.mxu0 0.0
    %657 = vmatpush1.msra.mxu0 0.0
    %658 = vmatprep.subr.mxu0 0.0
    %659 = vmatpush1.msra.mxu0 0.0
    %660 = vmatprep.subr.mxu0 0.0
    %661 = vmatpush1.msra.mxu0 0.0
    %662 = vmatprep.subr.mxu0 0.0
    %663 = vmatpush1.msra.mxu0 0.0
    %664 = vmatprep.subr.mxu0 0.0
    %665 = vmatpush1.msra.mxu0 0.0
    %666 = vmatprep.subr.mxu0 0.0
    %667 = vmatpush1.msra.mxu0 0.0
    %668 = vmatprep.subr.mxu0 0.0
    %669 = vmatpush1.msra.mxu0 0.0
    %670 = vmatprep.subr.mxu0 0.0
    %671 = vmatpush1.msra.mxu0 0.0
    %672 = vmatprep.mubr.f32.mxu0 0.0
    %673 = vmatmul.mubr.f32.gmra.mrb[0].mxu0 %v606
    %v674 = vpop.f32.mrb[0].mxu0
    %v675 = vadd.f32 0.0, %v674
    %v676 = vpop.f32.mrb[0].mxu0
    %677 = vdwg.mxu0
    %v678 = vadd.f32 %v180, %v675
    %v679 = vxor.u32 %v678, 2147483648
    %v680 = vmul.f32 %v679, 1.442695
    %v681 = vpow.pop %v680
    %v682 = vadd.f32 %v681, 1.0
    %v683 = vrcp.pop %v682
    %v684 = vmul.f32 1.0, %v683
    %v685 = vtanh.pop %v678
    %v687 = vrot.slane %v595, 6
    %v689 = vmul.f32 %v684, %v687
    %691 = vrot.lane.b32.xlu0 %v685, 64
    %v692 = vpop.permute.xlu0 %691
    %v694 = vmul.f32 %v684, %v692
    %696 = vrot.lane.b32.xlu0 %v694, 32
    %v697 = vpop.permute.xlu0 %696
    %v699 = vadd.f32 %v689, %v697
    %v700 = vtanh.pop %v699
    %702 = vrot.lane.b32.xlu0 %v700, 64
    %v703 = vpop.permute.xlu0 %702
    %v705 = vmul.f32 %v684, %v703
    %707 = vrot.lane.b32.xlu0 %v705, 32
    %v708 = vpop.permute.xlu0 %707
    %v709 = vsel %vm183, %v708, 0
    %711 = vmatprep.subr.mxu0 0.0
    %712 = vmatpush1.msra.mxu0 %v90
    %713 = vmatprep.subr.mxu0 0.0
    %714 = vmatpush1.msra.mxu0 %v91
    %715 = vmatprep.subr.mxu0 0.0
    %716 = vmatpush1.msra.mxu0 %v92
    %717 = vmatprep.subr.mxu0 0.0
    %718 = vmatpush1.msra.mxu0 %v93
    %719 = vmatprep.subr.mxu0 0.0
    %720 = vmatpush1.msra.mxu0 0.0
    %721 = vmatprep.subr.mxu0 0.0
    %722 = vmatpush1.msra.mxu0 0.0
    %723 = vmatprep.subr.mxu0 0.0
    %724 = vmatpush1.msra.mxu0 0.0
    %725 = vmatprep.subr.mxu0 0.0
    %726 = vmatpush1.msra.mxu0 0.0
    %727 = vmatprep.subr.mxu0 0.0
    %728 = vmatpush1.msra.mxu0 0.0
    %729 = vmatprep.subr.mxu0 0.0
    %730 = vmatpush1.msra.mxu0 0.0
    %731 = vmatprep.subr.mxu0 0.0
    %732 = vmatpush1.msra.mxu0 0.0
    %733 = vmatprep.subr.mxu0 0.0
    %734 = vmatpush1.msra.mxu0 0.0
    %735 = vmatprep.subr.mxu0 0.0
    %736 = vmatpush1.msra.mxu0 0.0
    %737 = vmatprep.subr.mxu0 0.0
    %738 = vmatpush1.msra.mxu0 0.0
    %739 = vmatprep.subr.mxu0 0.0
    %740 = vmatpush1.msra.mxu0 0.0
    %741 = vmatprep.subr.mxu0 0.0
    %742 = vmatpush1.msra.mxu0 0.0
    %743 = vmatprep.subr.mxu0 0.0
    %744 = vmatpush1.msra.mxu0 0.0
    %745 = vmatprep.subr.mxu0 0.0
    %746 = vmatpush1.msra.mxu0 0.0
    %747 = vmatprep.subr.mxu0 0.0
    %748 = vmatpush1.msra.mxu0 0.0
    %749 = vmatprep.subr.mxu0 0.0
    %750 = vmatpush1.msra.mxu0 0.0
    %751 = vmatprep.subr.mxu0 0.0
    %752 = vmatpush1.msra.mxu0 0.0
    %753 = vmatprep.subr.mxu0 0.0
    %754 = vmatpush1.msra.mxu0 0.0
    %755 = vmatprep.subr.mxu0 0.0
    %756 = vmatpush1.msra.mxu0 0.0
    %757 = vmatprep.subr.mxu0 0.0
    %758 = vmatpush1.msra.mxu0 0.0
    %759 = vmatprep.subr.mxu0 0.0
    %760 = vmatpush1.msra.mxu0 0.0
    %761 = vmatprep.subr.mxu0 0.0
    %762 = vmatpush1.msra.mxu0 0.0
    %763 = vmatprep.subr.mxu0 0.0
    %764 = vmatpush1.msra.mxu0 0.0
    %765 = vmatprep.subr.mxu0 0.0
    %766 = vmatpush1.msra.mxu0 0.0
    %767 = vmatprep.subr.mxu0 0.0
    %768 = vmatpush1.msra.mxu0 0.0
    %769 = vmatprep.subr.mxu0 0.0
    %770 = vmatpush1.msra.mxu0 0.0
    %771 = vmatprep.subr.mxu0 0.0
    %772 = vmatpush1.msra.mxu0 0.0
    %773 = vmatprep.subr.mxu0 0.0
    %774 = vmatpush1.msra.mxu0 0.0
    %775 = vmatprep.mubr.f32.mxu0 0.0
    %776 = vmatmul.mubr.f32.gmra.mrb[0].mxu0 %v709
    %v777 = vpop.f32.mrb[0].mxu0
    %v778 = vadd.f32 0.0, %v777
    %v779 = vpop.f32.mrb[0].mxu0
    %780 = vdwg.mxu0
    %v782 = vrot.slane %v778, 6
    %v784 = vadd.f32 %v180, %v782
    %v785 = vxor.u32 %v784, 2147483648
    %v786 = vmul.f32 %v785, 1.442695
    %v787 = vpow.pop %v786
    %v788 = vadd.f32 %v787, 1.0
    %v789 = vrcp.pop %v788
    %v790 = vmul.f32 1.0, %v789
    %v791 = vtanh.pop %v784
    %v793 = vrot.slane %v699, 6
    %v795 = vmul.f32 %v790, %v793
    %797 = vrot.lane.b32.xlu0 %v791, 64
    %v798 = vpop.permute.xlu0 %797
    %v800 = vmul.f32 %v790, %v798
    %802 = vrot.lane.b32.xlu0 %v800, 32
    %v803 = vpop.permute.xlu0 %802
    %v805 = vadd.f32 %v795, %v803
    %v806 = vtanh.pop %v805
    %808 = vrot.lane.b32.xlu0 %v806, 64
    %v809 = vpop.permute.xlu0 %808
    %v811 = vmul.f32 %v790, %v809
    %v813 = vrot.slane %v811, 2
    %814 = vrot.lane.b32.xlu0 %v813, 32
    %v815 = vpop.permute.xlu0 %814
    %v816 = vsel %vm183, %v815, 0
    %818 = vmatprep.subr.mxu0 0.0
    %819 = vmatpush1.msra.mxu0 %v90
    %820 = vmatprep.subr.mxu0 0.0
    %821 = vmatpush1.msra.mxu0 %v91
    %822 = vmatprep.subr.mxu0 0.0
    %823 = vmatpush1.msra.mxu0 %v92
    %824 = vmatprep.subr.mxu0 0.0
    %825 = vmatpush1.msra.mxu0 %v93
    %826 = vmatprep.subr.mxu0 0.0
    %827 = vmatpush1.msra.mxu0 0.0
    %828 = vmatprep.subr.mxu0 0.0
    %829 = vmatpush1.msra.mxu0 0.0
    %830 = vmatprep.subr.mxu0 0.0
    %831 = vmatpush1.msra.mxu0 0.0
    %832 = vmatprep.subr.mxu0 0.0
    %833 = vmatpush1.msra.mxu0 0.0
    %834 = vmatprep.subr.mxu0 0.0
    %835 = vmatpush1.msra.mxu0 0.0
    %836 = vmatprep.subr.mxu0 0.0
    %837 = vmatpush1.msra.mxu0 0.0
    %838 = vmatprep.subr.mxu0 0.0
    %839 = vmatpush1.msra.mxu0 0.0
    %840 = vmatprep.subr.mxu0 0.0
    %841 = vmatpush1.msra.mxu0 0.0
    %842 = vmatprep.subr.mxu0 0.0
    %843 = vmatpush1.msra.mxu0 0.0
    %844 = vmatprep.subr.mxu0 0.0
    %845 = vmatpush1.msra.mxu0 0.0
    %846 = vmatprep.subr.mxu0 0.0
    %847 = vmatpush1.msra.mxu0 0.0
    %848 = vmatprep.subr.mxu0 0.0
    %849 = vmatpush1.msra.mxu0 0.0
    %850 = vmatprep.subr.mxu0 0.0
    %851 = vmatpush1.msra.mxu0 0.0
    %852 = vmatprep.subr.mxu0 0.0
    %853 = vmatpush1.msra.mxu0 0.0
    %854 = vmatprep.subr.mxu0 0.0
    %855 = vmatpush1.msra.mxu0 0.0
    %856 = vmatprep.subr.mxu0 0.0
    %857 = vmatpush1.msra.mxu0 0.0
    %858 = vmatprep.subr.mxu0 0.0
    %859 = vmatpush1.msra.mxu0 0.0
    %860 = vmatprep.subr.mxu0 0.0
    %861 = vmatpush1.msra.mxu0 0.0
    %862 = vmatprep.subr.mxu0 0.0
    %863 = vmatpush1.msra.mxu0 0.0
    %864 = vmatprep.subr.mxu0 0.0
    %865 = vmatpush1.msra.mxu0 0.0
    %866 = vmatprep.subr.mxu0 0.0
    %867 = vmatpush1.msra.mxu0 0.0
    %868 = vmatprep.subr.mxu0 0.0
    %869 = vmatpush1.msra.mxu0 0.0
    %870 = vmatprep.subr.mxu0 0.0
    %871 = vmatpush1.msra.mxu0 0.0
    %872 = vmatprep.subr.mxu0 0.0
    %873 = vmatpush1.msra.mxu0 0.0
    %874 = vmatprep.subr.mxu0 0.0
    %875 = vmatpush1.msra.mxu0 0.0
    %876 = vmatprep.subr.mxu0 0.0
    %877 = vmatpush1.msra.mxu0 0.0
    %878 = vmatprep.subr.mxu0 0.0
    %879 = vmatpush1.msra.mxu0 0.0
    %880 = vmatprep.subr.mxu0 0.0
    %881 = vmatpush1.msra.mxu0 0.0
    %882 = vmatprep.mubr.f32.mxu0 0.0
    %883 = vmatmul.mubr.f32.gmra.mrb[0].mxu0 %v816
    %v884 = vpop.f32.mrb[0].mxu0
    %v885 = vadd.f32 0.0, %v884
    %v886 = vpop.f32.mrb[0].mxu0
    %887 = vdwg.mxu0
    %v889 = vrot.slane %v885, 4
    %v891 = vadd.f32 %v180, %v889
    %v892 = vxor.u32 %v891, 2147483648
    %v893 = vmul.f32 %v892, 1.442695
    %v894 = vpow.pop %v893
    %v895 = vadd.f32 %v894, 1.0
    %v896 = vrcp.pop %v895
    %v897 = vmul.f32 1.0, %v896
    %v898 = vtanh.pop %v891
    %v900 = vrot.slane %v805, 6
    %v902 = vmul.f32 %v897, %v900
    %904 = vrot.lane.b32.xlu0 %v898, 64
    %v905 = vpop.permute.xlu0 %904
    %v907 = vmul.f32 %v897, %v905
    %909 = vrot.lane.b32.xlu0 %v907, 32
    %v910 = vpop.permute.xlu0 %909
    %v912 = vadd.f32 %v902, %v910
    %v913 = vtanh.pop %v912
    %915 = vrot.lane.b32.xlu0 %v913, 64
    %v916 = vpop.permute.xlu0 %915
    %v918 = vmul.f32 %v897, %v916
    %v920 = vrot.slane %v918, 4
    %921 = vrot.lane.b32.xlu0 %v920, 32
    %v922 = vpop.permute.xlu0 %921
    %v923 = vsel %vm183, %v922, 0
    %925 = vmatprep.subr.mxu0 0.0
    %926 = vmatpush1.msra.mxu0 %v90
    %927 = vmatprep.subr.mxu0 0.0
    %928 = vmatpush1.msra.mxu0 %v91
    %929 = vmatprep.subr.mxu0 0.0
    %930 = vmatpush1.msra.mxu0 %v92
    %931 = vmatprep.subr.mxu0 0.0
    %932 = vmatpush1.msra.mxu0 %v93
    %933 = vmatprep.subr.mxu0 0.0
    %934 = vmatpush1.msra.mxu0 0.0
    %935 = vmatprep.subr.mxu0 0.0
    %936 = vmatpush1.msra.mxu0 0.0
    %937 = vmatprep.subr.mxu0 0.0
    %938 = vmatpush1.msra.mxu0 0.0
    %939 = vmatprep.subr.mxu0 0.0
    %940 = vmatpush1.msra.mxu0 0.0
    %941 = vmatprep.subr.mxu0 0.0
    %942 = vmatpush1.msra.mxu0 0.0
    %943 = vmatprep.subr.mxu0 0.0
    %944 = vmatpush1.msra.mxu0 0.0
    %945 = vmatprep.subr.mxu0 0.0
    %946 = vmatpush1.msra.mxu0 0.0
    %947 = vmatprep.subr.mxu0 0.0
    %948 = vmatpush1.msra.mxu0 0.0
    %949 = vmatprep.subr.mxu0 0.0
    %950 = vmatpush1.msra.mxu0 0.0
    %951 = vmatprep.subr.mxu0 0.0
    %952 = vmatpush1.msra.mxu0 0.0
    %953 = vmatprep.subr.mxu0 0.0
    %954 = vmatpush1.msra.mxu0 0.0
    %955 = vmatprep.subr.mxu0 0.0
    %956 = vmatpush1.msra.mxu0 0.0
    %957 = vmatprep.subr.mxu0 0.0
    %958 = vmatpush1.msra.mxu0 0.0
    %959 = vmatprep.subr.mxu0 0.0
    %960 = vmatpush1.msra.mxu0 0.0
    %961 = vmatprep.subr.mxu0 0.0
    %962 = vmatpush1.msra.mxu0 0.0
    %963 = vmatprep.subr.mxu0 0.0
    %964 = vmatpush1.msra.mxu0 0.0
    %965 = vmatprep.subr.mxu0 0.0
    %966 = vmatpush1.msra.mxu0 0.0
    %967 = vmatprep.subr.mxu0 0.0
    %968 = vmatpush1.msra.mxu0 0.0
    %969 = vmatprep.subr.mxu0 0.0
    %970 = vmatpush1.msra.mxu0 0.0
    %971 = vmatprep.subr.mxu0 0.0
    %972 = vmatpush1.msra.mxu0 0.0
    %973 = vmatprep.subr.mxu0 0.0
    %974 = vmatpush1.msra.mxu0 0.0
    %975 = vmatprep.subr.mxu0 0.0
    %976 = vmatpush1.msra.mxu0 0.0
    %977 = vmatprep.subr.mxu0 0.0
    %978 = vmatpush1.msra.mxu0 0.0
    %979 = vmatprep.subr.mxu0 0.0
    %980 = vmatpush1.msra.mxu0 0.0
    %981 = vmatprep.subr.mxu0 0.0
    %982 = vmatpush1.msra.mxu0 0.0
    %983 = vmatprep.subr.mxu0 0.0
    %984 = vmatpush1.msra.mxu0 0.0
    %985 = vmatprep.subr.mxu0 0.0
    %986 = vmatpush1.msra.mxu0 0.0
    %987 = vmatprep.subr.mxu0 0.0
    %988 = vmatpush1.msra.mxu0 0.0
    %989 = vmatprep.mubr.f32.mxu0 0.0
    %990 = vmatmul.mubr.f32.gmra.mrb[0].mxu0 %v923
    %v991 = vpop.f32.mrb[0].mxu0
    %v992 = vadd.f32 0.0, %v991
    %v993 = vpop.f32.mrb[0].mxu0
    %994 = vdwg.mxu0
    %v996 = vrot.slane %v992, 2
    %v998 = vadd.f32 %v180, %v996
    %v999 = vxor.u32 %v998, 2147483648
    %v1000 = vmul.f32 %v999, 1.442695
    %v1001 = vpow.pop %v1000
    %v1002 = vadd.f32 %v1001, 1.0
    %v1003 = vrcp.pop %v1002
    %v1004 = vmul.f32 1.0, %v1003
    %v1005 = vtanh.pop %v998
    %v1007 = vrot.slane %v912, 6
    %v1009 = vmul.f32 %v1004, %v1007
    %1011 = vrot.lane.b32.xlu0 %v1005, 64
    %v1012 = vpop.permute.xlu0 %1011
    %v1014 = vmul.f32 %v1004, %v1012
    %1016 = vrot.lane.b32.xlu0 %v1014, 32
    %v1017 = vpop.permute.xlu0 %1016
    %v1019 = vadd.f32 %v1009, %v1017
    %v1020 = vtanh.pop %v1019
    %1022 = vrot.lane.b32.xlu0 %v1020, 64
    %v1023 = vpop.permute.xlu0 %1022
    %v1025 = vmul.f32 %v1004, %v1023
    %v1026 = vadd.f32 %v1025, 0.0
    %1028 = vrot.lane.b32.xlu0 %v1026, 32
    %v1029 = vpop.permute.xlu0 %1028
    %vm1031 = vcmask 261126
    %1032 = vst.msk [vmem:[#allocation11 - $0x6] sm:$0xc0] %vm1031, %v1029
    %v1033 = vld [vmem:[%s5] sm:$0xff]
    %v1034 = vld [vmem:[%s5 + $0x8] sm:$0xff]
    %v1035 = vld [vmem:[%s5 + $0x10] sm:$0xff]
    %v1036 = vld [vmem:[%s5 + $0x18] sm:$0xff]
    %v1037 = vld [vmem:[%s5 + $0x20] sm:$0xff]
    %v1038 = vld [vmem:[%s5 + $0x28] sm:$0xff]
    %v1039 = vld [vmem:[%s5 + $0x30] sm:$0xff]
    %v1040 = vld [vmem:[%s5 + $0x38] sm:$0xff]
    %v1041 = vld [vmem:[%s5 + $0x40] sm:$0xff]
    %v1042 = vld [vmem:[%s5 + $0x48] sm:$0xff]
    %v1043 = vld [vmem:[%s5 + $0x50] sm:$0xff]
    %v1044 = vld [vmem:[%s5 + $0x58] sm:$0xff]
    %v1045 = vld [vmem:[%s5 + $0x60] sm:$0xff]
    %v1046 = vld [vmem:[%s5 + $0x68] sm:$0xff]
    %v1047 = vld [vmem:[%s5 + $0x70] sm:$0xff]
    %v1048 = vld [vmem:[%s5 + $0x78] sm:$0xff]
    %v1049 = vld [vmem:[%s6] sm:$0x3]
    %v1050 = vld [vmem:[#allocation8] sm:$0xff]
    %v1051 = vld [vmem:[#allocation8 + $0x8] sm:$0xff]
    %v1052 = vld [vmem:[#allocation8 + $0x10] sm:$0xff]
    %v1053 = vld [vmem:[#allocation8 + $0x18] sm:$0xff]
    %v1054 = vld [vmem:[#allocation8 + $0x20] sm:$0xff]
    %v1055 = vld [vmem:[#allocation8 + $0x28] sm:$0xff]
    %v1056 = vld [vmem:[#allocation8 + $0x30] sm:$0xff]
    %v1057 = vld [vmem:[#allocation8 + $0x38] sm:$0xff]
    %v1059 = vlaneseq
    %v1060 = vshrl.u32 %v1059, 7
    %v1061 = vsub.s32 0, %v1060
    %v1062 = vrot.slane %v1049, %v1061
    %v1063 = vlaneseq
    %v1064 = vshrl.u32 %v1063, 7
    %v1065 = vsub.s32 1, %v1064
    %v1066 = vrot.slane %v1049, %v1065
    %v1069 = vrot.slane %v1026, 6
    %1070 = vrot.lane.b32.xlu0 %v1069, 32
    %v1071 = vpop.permute.xlu0 %1070
    %v1072 = vsel %vm183, %v1071, 0
    %1074 = vmatprep.subr.mxu0 %v1051
    %1075 = vmatpush1.msra.mxu0 %v1050
    %1076 = vmatprep.subr.mxu0 %v1053
    %1077 = vmatpush1.msra.mxu0 %v1052
    %1078 = vmatprep.subr.mxu0 %v1055
    %1079 = vmatpush1.msra.mxu0 %v1054
    %1080 = vmatprep.subr.mxu0 %v1057
    %1081 = vmatpush1.msra.mxu0 %v1056
    %1082 = vmatprep.subr.mxu0 0.0
    %1083 = vmatpush1.msra.mxu0 0.0
    %1084 = vmatprep.subr.mxu0 0.0
    %1085 = vmatpush1.msra.mxu0 0.0
    %1086 = vmatprep.subr.mxu0 0.0
    %1087 = vmatpush1.msra.mxu0 0.0
    %1088 = vmatprep.subr.mxu0 0.0
    %1089 = vmatpush1.msra.mxu0 0.0
    %1090 = vmatprep.subr.mxu0 0.0
    %1091 = vmatpush1.msra.mxu0 0.0
    %1092 = vmatprep.subr.mxu0 0.0
    %1093 = vmatpush1.msra.mxu0 0.0
    %1094 = vmatprep.subr.mxu0 0.0
    %1095 = vmatpush1.msra.mxu0 0.0
    %1096 = vmatprep.subr.mxu0 0.0
    %1097 = vmatpush1.msra.mxu0 0.0
    %1098 = vmatprep.subr.mxu0 0.0
    %1099 = vmatpush1.msra.mxu0 0.0
    %1100 = vmatprep.subr.mxu0 0.0
    %1101 = vmatpush1.msra.mxu0 0.0
    %1102 = vmatprep.subr.mxu0 0.0
    %1103 = vmatpush1.msra.mxu0 0.0
    %1104 = vmatprep.subr.mxu0 0.0
    %1105 = vmatpush1.msra.mxu0 0.0
    %1106 = vmatprep.subr.mxu0 0.0
    %1107 = vmatpush1.msra.mxu0 0.0
    %1108 = vmatprep.subr.mxu0 0.0
    %1109 = vmatpush1.msra.mxu0 0.0
    %1110 = vmatprep.subr.mxu0 0.0
    %1111 = vmatpush1.msra.mxu0 0.0
    %1112 = vmatprep.subr.mxu0 0.0
    %1113 = vmatpush1.msra.mxu0 0.0
    %1114 = vmatprep.subr.mxu0 0.0
    %1115 = vmatpush1.msra.mxu0 0.0
    %1116 = vmatprep.subr.mxu0 0.0
    %1117 = vmatpush1.msra.mxu0 0.0
    %1118 = vmatprep.subr.mxu0 0.0
    %1119 = vmatpush1.msra.mxu0 0.0
    %1120 = vmatprep.subr.mxu0 0.0
    %1121 = vmatpush1.msra.mxu0 0.0
    %1122 = vmatprep.subr.mxu0 0.0
    %1123 = vmatpush1.msra.mxu0 0.0
    %1124 = vmatprep.subr.mxu0 0.0
    %1125 = vmatpush1.msra.mxu0 0.0
    %1126 = vmatprep.subr.mxu0 0.0
    %1127 = vmatpush1.msra.mxu0 0.0
    %1128 = vmatprep.subr.mxu0 0.0
    %1129 = vmatpush1.msra.mxu0 0.0
    %1130 = vmatprep.subr.mxu0 0.0
    %1131 = vmatpush1.msra.mxu0 0.0
    %1132 = vmatprep.subr.mxu0 0.0
    %1133 = vmatpush1.msra.mxu0 0.0
    %1134 = vmatprep.subr.mxu0 0.0
    %1135 = vmatpush1.msra.mxu0 0.0
    %1136 = vmatprep.subr.mxu0 0.0
    %1137 = vmatpush1.msra.mxu0 0.0
    %1138 = vmatprep.mubr.f32.mxu0 0.0
    %1139 = vmatmul.mubr.f32.gmra.mrb[0].mxu0 %v1072
    %v1140 = vpop.f32.mrb[0].mxu0
    %v1141 = vadd.f32 %v1062, %v1140
    %v1142 = vpop.f32.mrb[0].mxu0
    %v1143 = vadd.f32 %v1066, %v1142
    %1144 = vdwg.mxu0
    %vm1145 = vcmask 523264
    %v1146 = vsel %vm1145, 0.0, 0
    %1148 = vmatprep.subr.mxu0 %v1034
    %1149 = vmatpush1.msra.mxu0 %v1033
    %1150 = vmatprep.subr.mxu0 %v1036
    %1151 = vmatpush1.msra.mxu0 %v1035
    %1152 = vmatprep.subr.mxu0 %v1038
    %1153 = vmatpush1.msra.mxu0 %v1037
    %1154 = vmatprep.subr.mxu0 %v1040
    %1155 = vmatpush1.msra.mxu0 %v1039
    %1156 = vmatprep.subr.mxu0 %v1042
    %1157 = vmatpush1.msra.mxu0 %v1041
    %1158 = vmatprep.subr.mxu0 %v1044
    %1159 = vmatpush1.msra.mxu0 %v1043
    %1160 = vmatprep.subr.mxu0 %v1046
    %1161 = vmatpush1.msra.mxu0 %v1045
    %1162 = vmatprep.subr.mxu0 %v1048
    %1163 = vmatpush1.msra.mxu0 %v1047
    %1164 = vmatprep.subr.mxu0 0.0
    %1165 = vmatpush1.msra.mxu0 0.0
    %1166 = vmatprep.subr.mxu0 0.0
    %1167 = vmatpush1.msra.mxu0 0.0
    %1168 = vmatprep.subr.mxu0 0.0
    %1169 = vmatpush1.msra.mxu0 0.0
    %1170 = vmatprep.subr.mxu0 0.0
    %1171 = vmatpush1.msra.mxu0 0.0
    %1172 = vmatprep.subr.mxu0 0.0
    %1173 = vmatpush1.msra.mxu0 0.0
    %1174 = vmatprep.subr.mxu0 0.0
    %1175 = vmatpush1.msra.mxu0 0.0
    %1176 = vmatprep.subr.mxu0 0.0
    %1177 = vmatpush1.msra.mxu0 0.0
    %1178 = vmatprep.subr.mxu0 0.0
    %1179 = vmatpush1.msra.mxu0 0.0
    %1180 = vmatprep.subr.mxu0 0.0
    %1181 = vmatpush1.msra.mxu0 0.0
    %1182 = vmatprep.subr.mxu0 0.0
    %1183 = vmatpush1.msra.mxu0 0.0
    %1184 = vmatprep.subr.mxu0 0.0
    %1185 = vmatpush1.msra.mxu0 0.0
    %1186 = vmatprep.subr.mxu0 0.0
    %1187 = vmatpush1.msra.mxu0 0.0
    %1188 = vmatprep.subr.mxu0 0.0
    %1189 = vmatpush1.msra.mxu0 0.0
    %1190 = vmatprep.subr.mxu0 0.0
    %1191 = vmatpush1.msra.mxu0 0.0
    %1192 = vmatprep.subr.mxu0 0.0
    %1193 = vmatpush1.msra.mxu0 0.0
    %1194 = vmatprep.subr.mxu0 0.0
    %1195 = vmatpush1.msra.mxu0 0.0
    %1196 = vmatprep.subr.mxu0 0.0
    %1197 = vmatpush1.msra.mxu0 0.0
    %1198 = vmatprep.subr.mxu0 0.0
    %1199 = vmatpush1.msra.mxu0 0.0
    %1200 = vmatprep.subr.mxu0 0.0
    %1201 = vmatpush1.msra.mxu0 0.0
    %1202 = vmatprep.subr.mxu0 0.0
    %1203 = vmatpush1.msra.mxu0 0.0
    %1204 = vmatprep.subr.mxu0 0.0
    %1205 = vmatpush1.msra.mxu0 0.0
    %1206 = vmatprep.subr.mxu0 0.0
    %1207 = vmatpush1.msra.mxu0 0.0
    %1208 = vmatprep.subr.mxu0 0.0
    %1209 = vmatpush1.msra.mxu0 0.0
    %1210 = vmatprep.subr.mxu0 0.0
    %1211 = vmatpush1.msra.mxu0 0.0
    %1212 = vmatprep.mubr.f32.mxu0 0.0
    %1213 = vmatmul.mubr.f32.gmra.mrb[0].mxu0 %v1146
    %v1214 = vpop.f32.mrb[0].mxu0
    %v1215 = vadd.f32 0.0, %v1214
    %v1216 = vpop.f32.mrb[0].mxu0
    %v1217 = vadd.f32 0.0, %v1216
    %1218 = vdwg.mxu0
    %v1219 = vadd.f32 %v1141, %v1215
    %v1220 = vadd.f32 %v1143, %v1217
    %v1221 = vxor.u32 %v1219, 2147483648
    %v1222 = vxor.u32 %v1220, 2147483648
    %v1223 = vmul.f32 %v1221, 1.442695
    %v1224 = vpow.pop %v1223
    %v1225 = vmul.f32 %v1222, 1.442695
    %v1226 = vpow.pop %v1225
    %v1227 = vadd.f32 %v1224, 1.0
    %v1228 = vadd.f32 %v1226, 1.0
    %v1229 = vrcp.pop %v1227
    %v1230 = vmul.f32 1.0, %v1229
    %v1231 = vrcp.pop %v1228
    %v1232 = vmul.f32 1.0, %v1231
    %v1233 = vtanh.pop %v1220
    %v1234 = vmul.f32 %v1230, 0.0
    %v1235 = vmul.f32 %v1230, %v1233
    %1237 = vrot.lane.b32.xlu0 %v1235, 64
    %v1238 = vpop.permute.xlu0 %1237
    %v1240 = vadd.f32 %v1234, %v1238
    %v1241 = vtanh.pop %v1240
    %v1242 = vmul.f32 %v1232, %v1241
    %1244 = vrot.lane.b32.xlu0 %v1242, 64
    %v1245 = vpop.permute.xlu0 %1244
    %vm1247 = vcmask 517120
    %1248 = vst.msk [vmem:[#allocation2] sm:$0x3] %vm1247, %v1245
    %v1249 = vsel %vm1145, %v1245, 0
    %1251 = vmatprep.subr.mxu0 %v1034
    %1252 = vmatpush1.msra.mxu0 %v1033
    %1253 = vmatprep.subr.mxu0 %v1036
    %1254 = vmatpush1.msra.mxu0 %v1035
    %1255 = vmatprep.subr.mxu0 %v1038
    %1256 = vmatpush1.msra.mxu0 %v1037
    %1257 = vmatprep.subr.mxu0 %v1040
    %1258 = vmatpush1.msra.mxu0 %v1039
    %1259 = vmatprep.subr.mxu0 %v1042
    %1260 = vmatpush1.msra.mxu0 %v1041
    %1261 = vmatprep.subr.mxu0 %v1044
    %1262 = vmatpush1.msra.mxu0 %v1043
    %1263 = vmatprep.subr.mxu0 %v1046
    %1264 = vmatpush1.msra.mxu0 %v1045
    %1265 = vmatprep.subr.mxu0 %v1048
    %1266 = vmatpush1.msra.mxu0 %v1047
    %1267 = vmatprep.subr.mxu0 0.0
    %1268 = vmatpush1.msra.mxu0 0.0
    %1269 = vmatprep.subr.mxu0 0.0
    %1270 = vmatpush1.msra.mxu0 0.0
    %1271 = vmatprep.subr.mxu0 0.0
    %1272 = vmatpush1.msra.mxu0 0.0
    %1273 = vmatprep.subr.mxu0 0.0
    %1274 = vmatpush1.msra.mxu0 0.0
    %1275 = vmatprep.subr.mxu0 0.0
    %1276 = vmatpush1.msra.mxu0 0.0
    %1277 = vmatprep.subr.mxu0 0.0
    %1278 = vmatpush1.msra.mxu0 0.0
    %1279 = vmatprep.subr.mxu0 0.0
    %1280 = vmatpush1.msra.mxu0 0.0
    %1281 = vmatprep.subr.mxu0 0.0
    %1282 = vmatpush1.msra.mxu0 0.0
    %1283 = vmatprep.subr.mxu0 0.0
    %1284 = vmatpush1.msra.mxu0 0.0
    %1285 = vmatprep.subr.mxu0 0.0
    %1286 = vmatpush1.msra.mxu0 0.0
    %1287 = vmatprep.subr.mxu0 0.0
    %1288 = vmatpush1.msra.mxu0 0.0
    %1289 = vmatprep.subr.mxu0 0.0
    %1290 = vmatpush1.msra.mxu0 0.0
    %1291 = vmatprep.subr.mxu0 0.0
    %1292 = vmatpush1.msra.mxu0 0.0
    %1293 = vmatprep.subr.mxu0 0.0
    %1294 = vmatpush1.msra.mxu0 0.0
    %1295 = vmatprep.subr.mxu0 0.0
    %1296 = vmatpush1.msra.mxu0 0.0
    %1297 = vmatprep.subr.mxu0 0.0
    %1298 = vmatpush1.msra.mxu0 0.0
    %1299 = vmatprep.subr.mxu0 0.0
    %1300 = vmatpush1.msra.mxu0 0.0
    %1301 = vmatprep.subr.mxu0 0.0
    %1302 = vmatpush1.msra.mxu0 0.0
    %1303 = vmatprep.subr.mxu0 0.0
    %1304 = vmatpush1.msra.mxu0 0.0
    %1305 = vmatprep.subr.mxu0 0.0
    %1306 = vmatpush1.msra.mxu0 0.0
    %1307 = vmatprep.subr.mxu0 0.0
    %1308 = vmatpush1.msra.mxu0 0.0
    %1309 = vmatprep.subr.mxu0 0.0
    %1310 = vmatpush1.msra.mxu0 0.0
    %1311 = vmatprep.subr.mxu0 0.0
    %1312 = vmatpush1.msra.mxu0 0.0
    %1313 = vmatprep.subr.mxu0 0.0
    %1314 = vmatpush1.msra.mxu0 0.0
    %1315 = vmatprep.mubr.f32.mxu0 0.0
    %1316 = vmatmul.mubr.f32.gmra.mrb[0].mxu0 %v1249
    %v1317 = vpop.f32.mrb[0].mxu0
    %v1318 = vadd.f32 0.0, %v1317
    %v1319 = vpop.f32.mrb[0].mxu0
    %v1320 = vadd.f32 0.0, %v1319
    %1321 = vdwg.mxu0
    %v1322 = vadd.f32 %v1141, %v1318
    %v1323 = vadd.f32 %v1143, %v1320
    %v1324 = vxor.u32 %v1322, 2147483648
    %v1325 = vxor.u32 %v1323, 2147483648
    %v1326 = vmul.f32 %v1324, 1.442695
    %v1327 = vpow.pop %v1326
    %v1328 = vmul.f32 %v1325, 1.442695
    %v1329 = vpow.pop %v1328
    %v1330 = vadd.f32 %v1327, 1.0
    %v1331 = vadd.f32 %v1329, 1.0
    %v1332 = vrcp.pop %v1330
    %v1333 = vmul.f32 1.0, %v1332
    %v1334 = vrcp.pop %v1331
    %v1335 = vmul.f32 1.0, %v1334
    %v1336 = vtanh.pop %v1323
    %v1337 = vmul.f32 %v1333, %v1240
    %v1338 = vmul.f32 %v1333, %v1336
    %1340 = vrot.lane.b32.xlu0 %v1338, 64
    %v1341 = vpop.permute.xlu0 %1340
    %v1343 = vadd.f32 %v1337, %v1341
    %v1344 = vtanh.pop %v1343
    %v1345 = vmul.f32 %v1335, %v1344
    %1347 = vrot.lane.b32.xlu0 %v1345, 64
    %v1348 = vpop.permute.xlu0 %1347
    %1350 = vst.msk [vmem:[#allocation2 + $0x2] sm:$0x3] %vm1247, %v1348
    %v1351 = vsel %vm1145, %v1348, 0
    %1353 = vmatprep.subr.mxu0 %v1034
    %1354 = vmatpush1.msra.mxu0 %v1033
    %1355 = vmatprep.subr.mxu0 %v1036
    %1356 = vmatpush1.msra.mxu0 %v1035
    %1357 = vmatprep.subr.mxu0 %v1038
    %1358 = vmatpush1.msra.mxu0 %v1037
    %1359 = vmatprep.subr.mxu0 %v1040
    %1360 = vmatpush1.msra.mxu0 %v1039
    %1361 = vmatprep.subr.mxu0 %v1042
    %1362 = vmatpush1.msra.mxu0 %v1041
    %1363 = vmatprep.subr.mxu0 %v1044
    %1364 = vmatpush1.msra.mxu0 %v1043
    %1365 = vmatprep.subr.mxu0 %v1046
    %1366 = vmatpush1.msra.mxu0 %v1045
    %1367 = vmatprep.subr.mxu0 %v1048
    %1368 = vmatpush1.msra.mxu0 %v1047
    %1369 = vmatprep.subr.mxu0 0.0
    %1370 = vmatpush1.msra.mxu0 0.0
    %1371 = vmatprep.subr.mxu0 0.0
    %1372 = vmatpush1.msra.mxu0 0.0
    %1373 = vmatprep.subr.mxu0 0.0
    %1374 = vmatpush1.msra.mxu0 0.0
    %1375 = vmatprep.subr.mxu0 0.0
    %1376 = vmatpush1.msra.mxu0 0.0
    %1377 = vmatprep.subr.mxu0 0.0
    %1378 = vmatpush1.msra.mxu0 0.0
    %1379 = vmatprep.subr.mxu0 0.0
    %1380 = vmatpush1.msra.mxu0 0.0
    %1381 = vmatprep.subr.mxu0 0.0
    %1382 = vmatpush1.msra.mxu0 0.0
    %1383 = vmatprep.subr.mxu0 0.0
    %1384 = vmatpush1.msra.mxu0 0.0
    %1385 = vmatprep.subr.mxu0 0.0
    %1386 = vmatpush1.msra.mxu0 0.0
    %1387 = vmatprep.subr.mxu0 0.0
    %1388 = vmatpush1.msra.mxu0 0.0
    %1389 = vmatprep.subr.mxu0 0.0
    %1390 = vmatpush1.msra.mxu0 0.0
    %1391 = vmatprep.subr.mxu0 0.0
    %1392 = vmatpush1.msra.mxu0 0.0
    %1393 = vmatprep.subr.mxu0 0.0
    %1394 = vmatpush1.msra.mxu0 0.0
    %1395 = vmatprep.subr.mxu0 0.0
    %1396 = vmatpush1.msra.mxu0 0.0
    %1397 = vmatprep.subr.mxu0 0.0
    %1398 = vmatpush1.msra.mxu0 0.0
    %1399 = vmatprep.subr.mxu0 0.0
    %1400 = vmatpush1.msra.mxu0 0.0
    %1401 = vmatprep.subr.mxu0 0.0
    %1402 = vmatpush1.msra.mxu0 0.0
    %1403 = vmatprep.subr.mxu0 0.0
    %1404 = vmatpush1.msra.mxu0 0.0
    %1405 = vmatprep.subr.mxu0 0.0
    %1406 = vmatpush1.msra.mxu0 0.0
    %1407 = vmatprep.subr.mxu0 0.0
    %1408 = vmatpush1.msra.mxu0 0.0
    %1409 = vmatprep.subr.mxu0 0.0
    %1410 = vmatpush1.msra.mxu0 0.0
    %1411 = vmatprep.subr.mxu0 0.0
    %1412 = vmatpush1.msra.mxu0 0.0
    %1413 = vmatprep.subr.mxu0 0.0
    %1414 = vmatpush1.msra.mxu0 0.0
    %1415 = vmatprep.subr.mxu0 0.0
    %1416 = vmatpush1.msra.mxu0 0.0
    %1417 = vmatprep.mubr.f32.mxu0 0.0
    %1418 = vmatmul.mubr.f32.gmra.mrb[0].mxu0 %v1351
    %v1419 = vpop.f32.mrb[0].mxu0
    %v1420 = vadd.f32 0.0, %v1419
    %v1421 = vpop.f32.mrb[0].mxu0
    %v1422 = vadd.f32 0.0, %v1421
    %1423 = vdwg.mxu0
    %v1424 = vadd.f32 %v1141, %v1420
    %v1425 = vadd.f32 %v1143, %v1422
    %v1426 = vxor.u32 %v1424, 2147483648
    %v1427 = vxor.u32 %v1425, 2147483648
    %v1428 = vmul.f32 %v1426, 1.442695
    %v1429 = vpow.pop %v1428
    %v1430 = vmul.f32 %v1427, 1.442695
    %v1431 = vpow.pop %v1430
    %v1432 = vadd.f32 %v1429, 1.0
    %v1433 = vadd.f32 %v1431, 1.0
    %v1434 = vrcp.pop %v1432
    %v1435 = vmul.f32 1.0, %v1434
    %v1436 = vrcp.pop %v1433
    %v1437 = vmul.f32 1.0, %v1436
    %v1438 = vtanh.pop %v1425
    %v1439 = vmul.f32 %v1435, %v1343
    %v1440 = vmul.f32 %v1435, %v1438
    %1442 = vrot.lane.b32.xlu0 %v1440, 64
    %v1443 = vpop.permute.xlu0 %1442
    %v1445 = vadd.f32 %v1439, %v1443
    %v1446 = vtanh.pop %v1445
    %v1447 = vmul.f32 %v1437, %v1446
    %1449 = vrot.lane.b32.xlu0 %v1447, 64
    %v1450 = vpop.permute.xlu0 %1449
    %1452 = vst.msk [vmem:[#allocation2 + $0x4] sm:$0x3] %vm1247, %v1450
    %v1453 = vsel %vm1145, %v1450, 0
    %1455 = vmatprep.subr.mxu0 %v1034
    %1456 = vmatpush1.msra.mxu0 %v1033
    %1457 = vmatprep.subr.mxu0 %v1036
    %1458 = vmatpush1.msra.mxu0 %v1035
    %1459 = vmatprep.subr.mxu0 %v1038
    %1460 = vmatpush1.msra.mxu0 %v1037
    %1461 = vmatprep.subr.mxu0 %v1040
    %1462 = vmatpush1.msra.mxu0 %v1039
    %1463 = vmatprep.subr.mxu0 %v1042
    %1464 = vmatpush1.msra.mxu0 %v1041
    %1465 = vmatprep.subr.mxu0 %v1044
    %1466 = vmatpush1.msra.mxu0 %v1043
    %1467 = vmatprep.subr.mxu0 %v1046
    %1468 = vmatpush1.msra.mxu0 %v1045
    %1469 = vmatprep.subr.mxu0 %v1048
    %1470 = vmatpush1.msra.mxu0 %v1047
    %1471 = vmatprep.subr.mxu0 0.0
    %1472 = vmatpush1.msra.mxu0 0.0
    %1473 = vmatprep.subr.mxu0 0.0
    %1474 = vmatpush1.msra.mxu0 0.0
    %1475 = vmatprep.subr.mxu0 0.0
    %1476 = vmatpush1.msra.mxu0 0.0
    %1477 = vmatprep.subr.mxu0 0.0
    %1478 = vmatpush1.msra.mxu0 0.0
    %1479 = vmatprep.subr.mxu0 0.0
    %1480 = vmatpush1.msra.mxu0 0.0
    %1481 = vmatprep.subr.mxu0 0.0
    %1482 = vmatpush1.msra.mxu0 0.0
    %1483 = vmatprep.subr.mxu0 0.0
    %1484 = vmatpush1.msra.mxu0 0.0
    %1485 = vmatprep.subr.mxu0 0.0
    %1486 = vmatpush1.msra.mxu0 0.0
    %1487 = vmatprep.subr.mxu0 0.0
    %1488 = vmatpush1.msra.mxu0 0.0
    %1489 = vmatprep.subr.mxu0 0.0
    %1490 = vmatpush1.msra.mxu0 0.0
    %1491 = vmatprep.subr.mxu0 0.0
    %1492 = vmatpush1.msra.mxu0 0.0
    %1493 = vmatprep.subr.mxu0 0.0
    %1494 = vmatpush1.msra.mxu0 0.0
    %1495 = vmatprep.subr.mxu0 0.0
    %1496 = vmatpush1.msra.mxu0 0.0
    %1497 = vmatprep.subr.mxu0 0.0
    %1498 = vmatpush1.msra.mxu0 0.0
    %1499 = vmatprep.subr.mxu0 0.0
    %1500 = vmatpush1.msra.mxu0 0.0
    %1501 = vmatprep.subr.mxu0 0.0
    %1502 = vmatpush1.msra.mxu0 0.0
    %1503 = vmatprep.subr.mxu0 0.0
    %1504 = vmatpush1.msra.mxu0 0.0
    %1505 = vmatprep.subr.mxu0 0.0
    %1506 = vmatpush1.msra.mxu0 0.0
    %1507 = vmatprep.subr.mxu0 0.0
    %1508 = vmatpush1.msra.mxu0 0.0
    %1509 = vmatprep.subr.mxu0 0.0
    %1510 = vmatpush1.msra.mxu0 0.0
    %1511 = vmatprep.subr.mxu0 0.0
    %1512 = vmatpush1.msra.mxu0 0.0
    %1513 = vmatprep.subr.mxu0 0.0
    %1514 = vmatpush1.msra.mxu0 0.0
    %1515 = vmatprep.subr.mxu0 0.0
    %1516 = vmatpush1.msra.mxu0 0.0
    %1517 = vmatprep.subr.mxu0 0.0
    %1518 = vmatpush1.msra.mxu0 0.0
    %1519 = vmatprep.mubr.f32.mxu0 0.0
    %1520 = vmatmul.mubr.f32.gmra.mrb[0].mxu0 %v1453
    %v1521 = vpop.f32.mrb[0].mxu0
    %v1522 = vadd.f32 0.0, %v1521
    %v1523 = vpop.f32.mrb[0].mxu0
    %v1524 = vadd.f32 0.0, %v1523
    %1525 = vdwg.mxu0
    %v1526 = vadd.f32 %v1141, %v1522
    %v1527 = vadd.f32 %v1143, %v1524
    %v1528 = vxor.u32 %v1526, 2147483648
    %v1529 = vxor.u32 %v1527, 2147483648
    %v1530 = vmul.f32 %v1528, 1.442695
    %v1531 = vpow.pop %v1530
    %v1532 = vmul.f32 %v1529, 1.442695
    %v1533 = vpow.pop %v1532
    %v1534 = vadd.f32 %v1531, 1.0
    %v1535 = vadd.f32 %v1533, 1.0
    %v1536 = vrcp.pop %v1534
    %v1537 = vmul.f32 1.0, %v1536
    %v1538 = vrcp.pop %v1535
    %v1539 = vmul.f32 1.0, %v1538
    %v1540 = vtanh.pop %v1527
    %v1541 = vmul.f32 %v1537, %v1445
    %v1542 = vmul.f32 %v1537, %v1540
    %1544 = vrot.lane.b32.xlu0 %v1542, 64
    %v1545 = vpop.permute.xlu0 %1544
    %v1547 = vadd.f32 %v1541, %v1545
    %v1548 = vtanh.pop %v1547
    %v1549 = vmul.f32 %v1539, %v1548
    %1551 = vrot.lane.b32.xlu0 %v1549, 64
    %v1552 = vpop.permute.xlu0 %1551
    %1554 = vst.msk [vmem:[#allocation2 + $0x6] sm:$0x3] %vm1247, %v1552
    %v1555 = vsel %vm1145, %v1552, 0
    %1557 = vmatprep.subr.mxu0 %v1034
    %1558 = vmatpush1.msra.mxu0 %v1033
    %1559 = vmatprep.subr.mxu0 %v1036
    %1560 = vmatpush1.msra.mxu0 %v1035
    %1561 = vmatprep.subr.mxu0 %v1038
    %1562 = vmatpush1.msra.mxu0 %v1037
    %1563 = vmatprep.subr.mxu0 %v1040
    %1564 = vmatpush1.msra.mxu0 %v1039
    %1565 = vmatprep.subr.mxu0 %v1042
    %1566 = vmatpush1.msra.mxu0 %v1041
    %1567 = vmatprep.subr.mxu0 %v1044
    %1568 = vmatpush1.msra.mxu0 %v1043
    %1569 = vmatprep.subr.mxu0 %v1046
    %1570 = vmatpush1.msra.mxu0 %v1045
    %1571 = vmatprep.subr.mxu0 %v1048
    %1572 = vmatpush1.msra.mxu0 %v1047
    %1573 = vmatprep.subr.mxu0 0.0
    %1574 = vmatpush1.msra.mxu0 0.0
    %1575 = vmatprep.subr.mxu0 0.0
    %1576 = vmatpush1.msra.mxu0 0.0
    %1577 = vmatprep.subr.mxu0 0.0
    %1578 = vmatpush1.msra.mxu0 0.0
    %1579 = vmatprep.subr.mxu0 0.0
    %1580 = vmatpush1.msra.mxu0 0.0
    %1581 = vmatprep.subr.mxu0 0.0
    %1582 = vmatpush1.msra.mxu0 0.0
    %1583 = vmatprep.subr.mxu0 0.0
    %1584 = vmatpush1.msra.mxu0 0.0
    %1585 = vmatprep.subr.mxu0 0.0
    %1586 = vmatpush1.msra.mxu0 0.0
    %1587 = vmatprep.subr.mxu0 0.0
    %1588 = vmatpush1.msra.mxu0 0.0
    %1589 = vmatprep.subr.mxu0 0.0
    %1590 = vmatpush1.msra.mxu0 0.0
    %1591 = vmatprep.subr.mxu0 0.0
    %1592 = vmatpush1.msra.mxu0 0.0
    %1593 = vmatprep.subr.mxu0 0.0
    %1594 = vmatpush1.msra.mxu0 0.0
    %1595 = vmatprep.subr.mxu0 0.0
    %1596 = vmatpush1.msra.mxu0 0.0
    %1597 = vmatprep.subr.mxu0 0.0
    %1598 = vmatpush1.msra.mxu0 0.0
    %1599 = vmatprep.subr.mxu0 0.0
    %1600 = vmatpush1.msra.mxu0 0.0
    %1601 = vmatprep.subr.mxu0 0.0
    %1602 = vmatpush1.msra.mxu0 0.0
    %1603 = vmatprep.subr.mxu0 0.0
    %1604 = vmatpush1.msra.mxu0 0.0
    %1605 = vmatprep.subr.mxu0 0.0
    %1606 = vmatpush1.msra.mxu0 0.0
    %1607 = vmatprep.subr.mxu0 0.0
    %1608 = vmatpush1.msra.mxu0 0.0
    %1609 = vmatprep.subr.mxu0 0.0
    %1610 = vmatpush1.msra.mxu0 0.0
    %1611 = vmatprep.subr.mxu0 0.0
    %1612 = vmatpush1.msra.mxu0 0.0
    %1613 = vmatprep.subr.mxu0 0.0
    %1614 = vmatpush1.msra.mxu0 0.0
    %1615 = vmatprep.subr.mxu0 0.0
    %1616 = vmatpush1.msra.mxu0 0.0
    %1617 = vmatprep.subr.mxu0 0.0
    %1618 = vmatpush1.msra.mxu0 0.0
    %1619 = vmatprep.subr.mxu0 0.0
    %1620 = vmatpush1.msra.mxu0 0.0
    %1621 = vmatprep.mubr.f32.mxu0 0.0
    %1622 = vmatmul.mubr.f32.gmra.mrb[0].mxu0 %v1555
    %v1623 = vpop.f32.mrb[0].mxu0
    %v1624 = vadd.f32 0.0, %v1623
    %v1625 = vpop.f32.mrb[0].mxu0
    %v1626 = vadd.f32 0.0, %v1625
    %1627 = vdwg.mxu0
    %v1628 = vadd.f32 %v1141, %v1624
    %v1629 = vadd.f32 %v1143, %v1626
    %v1630 = vxor.u32 %v1628, 2147483648
    %v1631 = vxor.u32 %v1629, 2147483648
    %v1632 = vmul.f32 %v1630, 1.442695
    %v1633 = vpow.pop %v1632
    %v1634 = vmul.f32 %v1631, 1.442695
    %v1635 = vpow.pop %v1634
    %v1636 = vadd.f32 %v1633, 1.0
    %v1637 = vadd.f32 %v1635, 1.0
    %v1638 = vrcp.pop %v1636
    %v1639 = vmul.f32 1.0, %v1638
    %v1640 = vrcp.pop %v1637
    %v1641 = vmul.f32 1.0, %v1640
    %v1642 = vtanh.pop %v1629
    %v1643 = vmul.f32 %v1639, %v1547
    %v1644 = vmul.f32 %v1639, %v1642
    %1646 = vrot.lane.b32.xlu0 %v1644, 64
    %v1647 = vpop.permute.xlu0 %1646
    %v1649 = vadd.f32 %v1643, %v1647
    %v1650 = vtanh.pop %v1649
    %v1651 = vmul.f32 %v1641, %v1650
    %1653 = vrot.lane.b32.xlu0 %v1651, 64
    %v1654 = vpop.permute.xlu0 %1653
    %1656 = vst.msk [vmem:[#allocation2 + $0x8] sm:$0x3] %vm1247, %v1654
    %v1657 = vsel %vm1145, %v1654, 0
    %1659 = vmatprep.subr.mxu0 %v1034
    %1660 = vmatpush1.msra.mxu0 %v1033
    %1661 = vmatprep.subr.mxu0 %v1036
    %1662 = vmatpush1.msra.mxu0 %v1035
    %1663 = vmatprep.subr.mxu0 %v1038
    %1664 = vmatpush1.msra.mxu0 %v1037
    %1665 = vmatprep.subr.mxu0 %v1040
    %1666 = vmatpush1.msra.mxu0 %v1039
    %1667 = vmatprep.subr.mxu0 %v1042
    %1668 = vmatpush1.msra.mxu0 %v1041
    %1669 = vmatprep.subr.mxu0 %v1044
    %1670 = vmatpush1.msra.mxu0 %v1043
    %1671 = vmatprep.subr.mxu0 %v1046
    %1672 = vmatpush1.msra.mxu0 %v1045
    %1673 = vmatprep.subr.mxu0 %v1048
    %1674 = vmatpush1.msra.mxu0 %v1047
    %1675 = vmatprep.subr.mxu0 0.0
    %1676 = vmatpush1.msra.mxu0 0.0
    %1677 = vmatprep.subr.mxu0 0.0
    %1678 = vmatpush1.msra.mxu0 0.0
    %1679 = vmatprep.subr.mxu0 0.0
    %1680 = vmatpush1.msra.mxu0 0.0
    %1681 = vmatprep.subr.mxu0 0.0
    %1682 = vmatpush1.msra.mxu0 0.0
    %1683 = vmatprep.subr.mxu0 0.0
    %1684 = vmatpush1.msra.mxu0 0.0
    %1685 = vmatprep.subr.mxu0 0.0
    %1686 = vmatpush1.msra.mxu0 0.0
    %1687 = vmatprep.subr.mxu0 0.0
    %1688 = vmatpush1.msra.mxu0 0.0
    %1689 = vmatprep.subr.mxu0 0.0
    %1690 = vmatpush1.msra.mxu0 0.0
    %1691 = vmatprep.subr.mxu0 0.0
    %1692 = vmatpush1.msra.mxu0 0.0
    %1693 = vmatprep.subr.mxu0 0.0
    %1694 = vmatpush1.msra.mxu0 0.0
    %1695 = vmatprep.subr.mxu0 0.0
    %1696 = vmatpush1.msra.mxu0 0.0
    %1697 = vmatprep.subr.mxu0 0.0
    %1698 = vmatpush1.msra.mxu0 0.0
    %1699 = vmatprep.subr.mxu0 0.0
    %1700 = vmatpush1.msra.mxu0 0.0
    %1701 = vmatprep.subr.mxu0 0.0
    %1702 = vmatpush1.msra.mxu0 0.0
    %1703 = vmatprep.subr.mxu0 0.0
    %1704 = vmatpush1.msra.mxu0 0.0
    %1705 = vmatprep.subr.mxu0 0.0
    %1706 = vmatpush1.msra.mxu0 0.0
    %1707 = vmatprep.subr.mxu0 0.0
    %1708 = vmatpush1.msra.mxu0 0.0
    %1709 = vmatprep.subr.mxu0 0.0
    %1710 = vmatpush1.msra.mxu0 0.0
    %1711 = vmatprep.subr.mxu0 0.0
    %1712 = vmatpush1.msra.mxu0 0.0
    %1713 = vmatprep.subr.mxu0 0.0
    %1714 = vmatpush1.msra.mxu0 0.0
    %1715 = vmatprep.subr.mxu0 0.0
    %1716 = vmatpush1.msra.mxu0 0.0
    %1717 = vmatprep.subr.mxu0 0.0
    %1718 = vmatpush1.msra.mxu0 0.0
    %1719 = vmatprep.subr.mxu0 0.0
    %1720 = vmatpush1.msra.mxu0 0.0
    %1721 = vmatprep.subr.mxu0 0.0
    %1722 = vmatpush1.msra.mxu0 0.0
    %1723 = vmatprep.mubr.f32.mxu0 0.0
    %1724 = vmatmul.mubr.f32.gmra.mrb[0].mxu0 %v1657
    %v1725 = vpop.f32.mrb[0].mxu0
    %v1726 = vadd.f32 0.0, %v1725
    %v1727 = vpop.f32.mrb[0].mxu0
    %v1728 = vadd.f32 0.0, %v1727
    %1729 = vdwg.mxu0
    %v1730 = vadd.f32 %v1141, %v1726
    %v1731 = vadd.f32 %v1143, %v1728
    %v1732 = vxor.u32 %v1730, 2147483648
    %v1733 = vxor.u32 %v1731, 2147483648
    %v1734 = vmul.f32 %v1732, 1.442695
    %v1735 = vpow.pop %v1734
    %v1736 = vmul.f32 %v1733, 1.442695
    %v1737 = vpow.pop %v1736
    %v1738 = vadd.f32 %v1735, 1.0
    %v1739 = vadd.f32 %v1737, 1.0
    %v1740 = vrcp.pop %v1738
    %v1741 = vmul.f32 1.0, %v1740
    %v1742 = vrcp.pop %v1739
    %v1743 = vmul.f32 1.0, %v1742
    %v1744 = vtanh.pop %v1731
    %v1745 = vmul.f32 %v1741, %v1649
    %v1746 = vmul.f32 %v1741, %v1744
    %1748 = vrot.lane.b32.xlu0 %v1746, 64
    %v1749 = vpop.permute.xlu0 %1748
    %v1751 = vadd.f32 %v1745, %v1749
    %v1752 = vtanh.pop %v1751
    %v1753 = vmul.f32 %v1743, %v1752
    %1755 = vrot.lane.b32.xlu0 %v1753, 64
    %v1756 = vpop.permute.xlu0 %1755
    %1758 = vst.msk [vmem:[#allocation2 + $0xa] sm:$0x3] %vm1247, %v1756
    %v1759 = vsel %vm1145, %v1756, 0
    %1761 = vmatprep.subr.mxu0 %v1034
    %1762 = vmatpush1.msra.mxu0 %v1033
    %1763 = vmatprep.subr.mxu0 %v1036
    %1764 = vmatpush1.msra.mxu0 %v1035
    %1765 = vmatprep.subr.mxu0 %v1038
    %1766 = vmatpush1.msra.mxu0 %v1037
    %1767 = vmatprep.subr.mxu0 %v1040
    %1768 = vmatpush1.msra.mxu0 %v1039
    %1769 = vmatprep.subr.mxu0 %v1042
    %1770 = vmatpush1.msra.mxu0 %v1041
    %1771 = vmatprep.subr.mxu0 %v1044
    %1772 = vmatpush1.msra.mxu0 %v1043
    %1773 = vmatprep.subr.mxu0 %v1046
    %1774 = vmatpush1.msra.mxu0 %v1045
    %1775 = vmatprep.subr.mxu0 %v1048
    %1776 = vmatpush1.msra.mxu0 %v1047
    %1777 = vmatprep.subr.mxu0 0.0
    %1778 = vmatpush1.msra.mxu0 0.0
    %1779 = vmatprep.subr.mxu0 0.0
    %1780 = vmatpush1.msra.mxu0 0.0
    %1781 = vmatprep.subr.mxu0 0.0
    %1782 = vmatpush1.msra.mxu0 0.0
    %1783 = vmatprep.subr.mxu0 0.0
    %1784 = vmatpush1.msra.mxu0 0.0
    %1785 = vmatprep.subr.mxu0 0.0
    %1786 = vmatpush1.msra.mxu0 0.0
    %1787 = vmatprep.subr.mxu0 0.0
    %1788 = vmatpush1.msra.mxu0 0.0
    %1789 = vmatprep.subr.mxu0 0.0
    %1790 = vmatpush1.msra.mxu0 0.0
    %1791 = vmatprep.subr.mxu0 0.0
    %1792 = vmatpush1.msra.mxu0 0.0
    %1793 = vmatprep.subr.mxu0 0.0
    %1794 = vmatpush1.msra.mxu0 0.0
    %1795 = vmatprep.subr.mxu0 0.0
    %1796 = vmatpush1.msra.mxu0 0.0
    %1797 = vmatprep.subr.mxu0 0.0
    %1798 = vmatpush1.msra.mxu0 0.0
    %1799 = vmatprep.subr.mxu0 0.0
    %1800 = vmatpush1.msra.mxu0 0.0
    %1801 = vmatprep.subr.mxu0 0.0
    %1802 = vmatpush1.msra.mxu0 0.0
    %1803 = vmatprep.subr.mxu0 0.0
    %1804 = vmatpush1.msra.mxu0 0.0
    %1805 = vmatprep.subr.mxu0 0.0
    %1806 = vmatpush1.msra.mxu0 0.0
    %1807 = vmatprep.subr.mxu0 0.0
    %1808 = vmatpush1.msra.mxu0 0.0
    %1809 = vmatprep.subr.mxu0 0.0
    %1810 = vmatpush1.msra.mxu0 0.0
    %1811 = vmatprep.subr.mxu0 0.0
    %1812 = vmatpush1.msra.mxu0 0.0
    %1813 = vmatprep.subr.mxu0 0.0
    %1814 = vmatpush1.msra.mxu0 0.0
    %1815 = vmatprep.subr.mxu0 0.0
    %1816 = vmatpush1.msra.mxu0 0.0
    %1817 = vmatprep.subr.mxu0 0.0
    %1818 = vmatpush1.msra.mxu0 0.0
    %1819 = vmatprep.subr.mxu0 0.0
    %1820 = vmatpush1.msra.mxu0 0.0
    %1821 = vmatprep.subr.mxu0 0.0
    %1822 = vmatpush1.msra.mxu0 0.0
    %1823 = vmatprep.subr.mxu0 0.0
    %1824 = vmatpush1.msra.mxu0 0.0
    %1825 = vmatprep.mubr.f32.mxu0 0.0
    %1826 = vmatmul.mubr.f32.gmra.mrb[0].mxu0 %v1759
    %v1827 = vpop.f32.mrb[0].mxu0
    %v1828 = vadd.f32 0.0, %v1827
    %v1829 = vpop.f32.mrb[0].mxu0
    %v1830 = vadd.f32 0.0, %v1829
    %1831 = vdwg.mxu0
    %v1832 = vadd.f32 %v1141, %v1828
    %v1833 = vadd.f32 %v1143, %v1830
    %v1834 = vxor.u32 %v1832, 2147483648
    %v1835 = vxor.u32 %v1833, 2147483648
    %v1836 = vmul.f32 %v1834, 1.442695
    %v1837 = vpow.pop %v1836
    %v1838 = vmul.f32 %v1835, 1.442695
    %v1839 = vpow.pop %v1838
    %v1840 = vadd.f32 %v1837, 1.0
    %v1841 = vadd.f32 %v1839, 1.0
    %v1842 = vrcp.pop %v1840
    %v1843 = vmul.f32 1.0, %v1842
    %v1844 = vrcp.pop %v1841
    %v1845 = vmul.f32 1.0, %v1844
    %v1846 = vtanh.pop %v1833
    %v1847 = vmul.f32 %v1843, %v1751
    %v1848 = vmul.f32 %v1843, %v1846
    %1850 = vrot.lane.b32.xlu0 %v1848, 64
    %v1851 = vpop.permute.xlu0 %1850
    %v1853 = vadd.f32 %v1847, %v1851
    %v1854 = vtanh.pop %v1853
    %v1855 = vmul.f32 %v1845, %v1854
    %1857 = vrot.lane.b32.xlu0 %v1855, 64
    %v1858 = vpop.permute.xlu0 %1857
    %1860 = vst.msk [vmem:[#allocation2 + $0xc] sm:$0x3] %vm1247, %v1858
    %v1861 = vsel %vm1145, %v1858, 0
    %1863 = vmatprep.subr.mxu0 %v1034
    %1864 = vmatpush1.msra.mxu0 %v1033
    %1865 = vmatprep.subr.mxu0 %v1036
    %1866 = vmatpush1.msra.mxu0 %v1035
    %1867 = vmatprep.subr.mxu0 %v1038
    %1868 = vmatpush1.msra.mxu0 %v1037
    %1869 = vmatprep.subr.mxu0 %v1040
    %1870 = vmatpush1.msra.mxu0 %v1039
    %1871 = vmatprep.subr.mxu0 %v1042
    %1872 = vmatpush1.msra.mxu0 %v1041
    %1873 = vmatprep.subr.mxu0 %v1044
    %1874 = vmatpush1.msra.mxu0 %v1043
    %1875 = vmatprep.subr.mxu0 %v1046
    %1876 = vmatpush1.msra.mxu0 %v1045
    %1877 = vmatprep.subr.mxu0 %v1048
    %1878 = vmatpush1.msra.mxu0 %v1047
    %1879 = vmatprep.subr.mxu0 0.0
    %1880 = vmatpush1.msra.mxu0 0.0
    %1881 = vmatprep.subr.mxu0 0.0
    %1882 = vmatpush1.msra.mxu0 0.0
    %1883 = vmatprep.subr.mxu0 0.0
    %1884 = vmatpush1.msra.mxu0 0.0
    %1885 = vmatprep.subr.mxu0 0.0
    %1886 = vmatpush1.msra.mxu0 0.0
    %1887 = vmatprep.subr.mxu0 0.0
    %1888 = vmatpush1.msra.mxu0 0.0
    %1889 = vmatprep.subr.mxu0 0.0
    %1890 = vmatpush1.msra.mxu0 0.0
    %1891 = vmatprep.subr.mxu0 0.0
    %1892 = vmatpush1.msra.mxu0 0.0
    %1893 = vmatprep.subr.mxu0 0.0
    %1894 = vmatpush1.msra.mxu0 0.0
    %1895 = vmatprep.subr.mxu0 0.0
    %1896 = vmatpush1.msra.mxu0 0.0
    %1897 = vmatprep.subr.mxu0 0.0
    %1898 = vmatpush1.msra.mxu0 0.0
    %1899 = vmatprep.subr.mxu0 0.0
    %1900 = vmatpush1.msra.mxu0 0.0
    %1901 = vmatprep.subr.mxu0 0.0
    %1902 = vmatpush1.msra.mxu0 0.0
    %1903 = vmatprep.subr.mxu0 0.0
    %1904 = vmatpush1.msra.mxu0 0.0
    %1905 = vmatprep.subr.mxu0 0.0
    %1906 = vmatpush1.msra.mxu0 0.0
    %1907 = vmatprep.subr.mxu0 0.0
    %1908 = vmatpush1.msra.mxu0 0.0
    %1909 = vmatprep.subr.mxu0 0.0
    %1910 = vmatpush1.msra.mxu0 0.0
    %1911 = vmatprep.subr.mxu0 0.0
    %1912 = vmatpush1.msra.mxu0 0.0
    %1913 = vmatprep.subr.mxu0 0.0
    %1914 = vmatpush1.msra.mxu0 0.0
    %1915 = vmatprep.subr.mxu0 0.0
    %1916 = vmatpush1.msra.mxu0 0.0
    %1917 = vmatprep.subr.mxu0 0.0
    %1918 = vmatpush1.msra.mxu0 0.0
    %1919 = vmatprep.subr.mxu0 0.0
    %1920 = vmatpush1.msra.mxu0 0.0
    %1921 = vmatprep.subr.mxu0 0.0
    %1922 = vmatpush1.msra.mxu0 0.0
    %1923 = vmatprep.subr.mxu0 0.0
    %1924 = vmatpush1.msra.mxu0 0.0
    %1925 = vmatprep.subr.mxu0 0.0
    %1926 = vmatpush1.msra.mxu0 0.0
    %1927 = vmatprep.mubr.f32.mxu0 0.0
    %1928 = vmatmul.mubr.f32.gmra.mrb[0].mxu0 %v1861
    %v1929 = vpop.f32.mrb[0].mxu0
    %v1930 = vadd.f32 0.0, %v1929
    %v1931 = vpop.f32.mrb[0].mxu0
    %v1932 = vadd.f32 0.0, %v1931
    %1933 = vdwg.mxu0
    %v1934 = vadd.f32 %v1141, %v1930
    %v1935 = vadd.f32 %v1143, %v1932
    %v1936 = vxor.u32 %v1934, 2147483648
    %v1937 = vxor.u32 %v1935, 2147483648
    %v1938 = vmul.f32 %v1936, 1.442695
    %v1939 = vpow.pop %v1938
    %v1940 = vmul.f32 %v1937, 1.442695
    %v1941 = vpow.pop %v1940
    %v1942 = vadd.f32 %v1939, 1.0
    %v1943 = vadd.f32 %v1941, 1.0
    %v1944 = vrcp.pop %v1942
    %v1945 = vmul.f32 1.0, %v1944
    %v1946 = vrcp.pop %v1943
    %v1947 = vmul.f32 1.0, %v1946
    %v1948 = vtanh.pop %v1935
    %v1949 = vmul.f32 %v1945, %v1853
    %v1950 = vmul.f32 %v1945, %v1948
    %1952 = vrot.lane.b32.xlu0 %v1950, 64
    %v1953 = vpop.permute.xlu0 %1952
    %v1955 = vadd.f32 %v1949, %v1953
    %v1956 = vtanh.pop %v1955
    %v1957 = vmul.f32 %v1947, %v1956
    %1959 = vrot.lane.b32.xlu0 %v1957, 64
    %v1960 = vpop.permute.xlu0 %1959
    %1962 = vst.msk [vmem:[#allocation2 + $0xe] sm:$0x3] %vm1247, %v1960
    %v1963 = vld [vmem:[#allocation2] sm:$0xff]
    %v1964 = vld [vmem:[#allocation2 + $0x8] sm:$0xff]
    %v1965 = vld [vmem:[%s7] sm:$0xff]
    %v1966 = vld [vmem:[%s7 + $0x8] sm:$0xff]
    %v1967 = vld [vmem:[%s7 + $0x10] sm:$0xff]
    %v1968 = vld [vmem:[%s7 + $0x18] sm:$0xff]
    %v1969 = vld [vmem:[%s7 + $0x20] sm:$0xff]
    %v1970 = vld [vmem:[%s7 + $0x28] sm:$0xff]
    %v1971 = vld [vmem:[%s7 + $0x30] sm:$0xff]
    %v1972 = vld [vmem:[%s7 + $0x38] sm:$0xff]
    %v1973 = vld [vmem:[#allocation9] sm:$0x1]
    %v1975 = vlaneseq
    %v1976 = vshrl.u32 %v1975, 7
    %v1977 = vsub.s32 0, %v1976
    %v1978 = vrot.slane %v1973, %v1977
    %v1981 = vsel %vm1145, %v1963, 0
    %v1984 = vsel %vm1145, %v1964, 0
    %1986 = vmatprep.subr.mxu0 0.0
    %1987 = vmatpush1.msra.mxu0 %v1965
    %1988 = vmatprep.subr.mxu0 0.0
    %1989 = vmatpush1.msra.mxu0 %v1966
    %1990 = vmatprep.subr.mxu0 0.0
    %1991 = vmatpush1.msra.mxu0 %v1967
    %1992 = vmatprep.subr.mxu0 0.0
    %1993 = vmatpush1.msra.mxu0 %v1968
    %1994 = vmatprep.subr.mxu0 0.0
    %1995 = vmatpush1.msra.mxu0 %v1969
    %1996 = vmatprep.subr.mxu0 0.0
    %1997 = vmatpush1.msra.mxu0 %v1970
    %1998 = vmatprep.subr.mxu0 0.0
    %1999 = vmatpush1.msra.mxu0 %v1971
    %2000 = vmatprep.subr.mxu0 0.0
    %2001 = vmatpush1.msra.mxu0 %v1972
    %2002 = vmatprep.subr.mxu0 0.0
    %2003 = vmatpush1.msra.mxu0 0.0
    %2004 = vmatprep.subr.mxu0 0.0
    %2005 = vmatpush1.msra.mxu0 0.0
    %2006 = vmatprep.subr.mxu0 0.0
    %2007 = vmatpush1.msra.mxu0 0.0
    %2008 = vmatprep.subr.mxu0 0.0
    %2009 = vmatpush1.msra.mxu0 0.0
    %2010 = vmatprep.subr.mxu0 0.0
    %2011 = vmatpush1.msra.mxu0 0.0
    %2012 = vmatprep.subr.mxu0 0.0
    %2013 = vmatpush1.msra.mxu0 0.0
    %2014 = vmatprep.subr.mxu0 0.0
    %2015 = vmatpush1.msra.mxu0 0.0
    %2016 = vmatprep.subr.mxu0 0.0
    %2017 = vmatpush1.msra.mxu0 0.0
    %2018 = vmatprep.subr.mxu0 0.0
    %2019 = vmatpush1.msra.mxu0 0.0
    %2020 = vmatprep.subr.mxu0 0.0
    %2021 = vmatpush1.msra.mxu0 0.0
    %2022 = vmatprep.subr.mxu0 0.0
    %2023 = vmatpush1.msra.mxu0 0.0
    %2024 = vmatprep.subr.mxu0 0.0
    %2025 = vmatpush1.msra.mxu0 0.0
    %2026 = vmatprep.subr.mxu0 0.0
    %2027 = vmatpush1.msra.mxu0 0.0
    %2028 = vmatprep.subr.mxu0 0.0
    %2029 = vmatpush1.msra.mxu0 0.0
    %2030 = vmatprep.subr.mxu0 0.0
    %2031 = vmatpush1.msra.mxu0 0.0
    %2032 = vmatprep.subr.mxu0 0.0
    %2033 = vmatpush1.msra.mxu0 0.0
    %2034 = vmatprep.subr.mxu0 0.0
    %2035 = vmatpush1.msra.mxu0 0.0
    %2036 = vmatprep.subr.mxu0 0.0
    %2037 = vmatpush1.msra.mxu0 0.0
    %2038 = vmatprep.subr.mxu0 0.0
    %2039 = vmatpush1.msra.mxu0 0.0
    %2040 = vmatprep.subr.mxu0 0.0
    %2041 = vmatpush1.msra.mxu0 0.0
    %2042 = vmatprep.subr.mxu0 0.0
    %2043 = vmatpush1.msra.mxu0 0.0
    %2044 = vmatprep.subr.mxu0 0.0
    %2045 = vmatpush1.msra.mxu0 0.0
    %2046 = vmatprep.subr.mxu0 0.0
    %2047 = vmatpush1.msra.mxu0 0.0
    %2048 = vmatprep.subr.mxu0 0.0
    %2049 = vmatpush1.msra.mxu0 0.0
    %2050 = vmatprep.mubr.f32.mxu0 0.0
    %2051 = vmatmul.mubr.f32.gmra.mrb[0].mxu0 %v1981
    %v2052 = vpop.f32.mrb[0].mxu0
    %v2053 = vadd.f32 %v1978, %v2052
    %v2054 = vpop.f32.mrb[0].mxu0
    %2055 = vmatprep.mubr.f32.mxu0 0.0
    %2056 = vmatmul.mubr.f32.gmra.mrb[0].mxu0 %v1984
    %v2057 = vpop.f32.mrb[0].mxu0
    %v2058 = vadd.f32 %v1978, %v2057
    %v2059 = vpop.f32.mrb[0].mxu0
    %2060 = vdwg.mxu0
    %2061 = vst.msk [vmem:[%s10] sm:$0xff] %vm183, %v2053
    %2062 = vst.msk [vmem:[%s10 + $0x8] sm:$0xff] %vm183, %v2058
    // Predicated region
    $region54: #{lstm_ae_forward.1} parent=1 // pred_check
      _
    $region55: #{lstm_ae_forward.1} parent=1 // pred_check_branch
      %2064 = sbr.rel (0) target = $region57
    $region56: #{lstm_ae_forward.1} parent=1 // pred_region
      %s2066 = ssub.s32 32, 32
      %2067 = vsyncadd [#allocation5], %s2066
      %s2069 = sshll.u32 [#allocation11], 4
      %s2070 = int_to_ptr.vmem [resolvable:$true] %s2069
      %2072 = dma.vmem_to_hbm [thread:$0]  %s2070, 32, %s9, [#allocation5]
    $region57: #{lstm_ae_forward.1} parent=1 // pred_fallthru
      _
    // Predicated region
    $region58: #{lstm_ae_forward.1} parent=1 // pred_check
      _
    $region59: #{lstm_ae_forward.1} parent=1 // pred_check_branch
      %2074 = sbr.rel (0) target = $region61
    $region60: #{lstm_ae_forward.1} parent=1 // pred_region
      _
    $region61: #{lstm_ae_forward.1} parent=1 // pred_fallthru
      _
    // Predicated region
    $region62: #{lstm_ae_forward.1} parent=1 // pred_check
      _
    $region63: #{lstm_ae_forward.1} parent=1 // pred_check_branch
      %2076 = sbr.rel (0) target = $region65
    $region64: #{lstm_ae_forward.1} parent=1 // pred_region
      %2077 = dma.done [#allocation5], 32
    $region65: #{lstm_ae_forward.1} parent=1 // pred_fallthru
      _
    // Predicated region
    $region66: #{lstm_ae_forward.1} parent=1 // pred_check
      _
    $region67: #{lstm_ae_forward.1} parent=1 // pred_check_branch
      %2079 = sbr.rel (0) target = $region69
    $region68: #{lstm_ae_forward.1} parent=1 // pred_region
      _
    $region69: #{lstm_ae_forward.1} parent=1 // pred_fallthru
      _
    %2080 = vsyncpa [#allocation4], 1
    %2081 = vsyncpa [#allocation7], 1
    %2082 = vsyncpa [#allocation10], 1
    %2083 = vsyncpa [#allocation5], 1

</llo_original>
